<compile_context>
chip_gen: v7x
topology: tpu7x:2x2x1
jax: 0.10.0
libtpu: 0.0.40
codegen_flags: <defaults>
</compile_context>

<pallas_src>
import functools

import jax
import jax.numpy as jnp
import numpy as np
from jax import lax
from jax.experimental import pallas as pl
from jax.experimental.pallas import tpu as pltpu


# ----------------------------------------------------------------------------
# Kernel
# ----------------------------------------------------------------------------
def fused_gat_kernel(h_ref, adj_ref, p_ref, out_ref, *,
                     layer_meta, heads, neg_slope):
    adj = adj_ref[...]                              # (N_dst, N_src), {0,1} f32
    # Additive edge mask, computed ONCE and shared by all heads & layers:
    # 0 on edges, -1e30 on non-edges (protects the row max; exp underflows to 0).
    neg_bias = (adj - 1.0) * 1e30
    n = adj.shape[0]
    ones_col = jnp.ones((n, 1), jnp.float32)

    h = h_ref[...]                                  # (N, F_in)
    num_layers = len(layer_meta)

    for li, (f_in, hd_tot, d, f_out, ow, oal, oar, olw, olb) in enumerate(layer_meta):
        # Static slices of the packed parameter buffer (8-aligned row offsets).
        w      = p_ref[ow:ow + f_in, 0:hd_tot]      # (F_in, H*D)
        al_blk = p_ref[oal:oal + heads, 0:hd_tot]   # (H, H*D) block-diagonal
        ar_blk = p_ref[oar:oar + heads, 0:hd_tot]   # (H, H*D) block-diagonal
        lw     = p_ref[olw:olw + hd_tot, 0:f_out]   # (H*D, F_out)
        lb     = p_ref[olb:olb + 1, 0:f_out]        # (1, F_out)  (GAT bias folded in)

        # One projection for all heads.
        z_all = jnp.dot(h, w, preferred_element_type=jnp.float32)       # (N, H*D)

        # Batched attention scores for all heads, on the MXU (no XLU transpose):
        #   el[hd, s] = <z_all[s, hd*D:(hd+1)*D], al[hd]>   (src scores, lane rows)
        #   er[d, hd] = <z_all[d, hd*D:(hd+1)*D], ar[hd]>   (dst scores, columns)
        el = lax.dot_general(al_blk, z_all, (((1,), (1,)), ((), ())),
                             preferred_element_type=jnp.float32)        # (H, N)
        er = lax.dot_general(z_all, ar_blk, (((1,), (1,)), ((), ())),
                             preferred_element_type=jnp.float32)        # (N, H)

        # Ones column folds the softmax denominator into the p @ z matmul.
        z_aug = jnp.concatenate([z_all, ones_col], axis=-1)             # (N, H*D+1)

        aggs = []
        for hd in range(heads):                     # heads is small & static (2)
            # e[d, s] = leaky_relu(er[d] + el[s]), masked edge-softmax over src.
            e = er[:, hd:hd + 1] + el[hd:hd + 1, :]                     # (N, N)
            e = jnp.maximum(e, neg_slope * e)                           # leaky relu
            e = e + neg_bias                                            # mask non-edges
            e = e - jnp.max(e, axis=1, keepdims=True)
            p = jnp.exp(e)              # non-edges underflow to exactly 0

            # p @ [z_all | 1]: this head's aggregation lives at cols hd*D:(hd+1)*D,
            # the softmax row-sum (denominator) at the last column.
            u = jnp.dot(p, z_aug, preferred_element_type=jnp.float32)   # (N, H*D+1)
            denom = jnp.maximum(u[:, hd_tot:hd_tot + 1], 1e-30)         # (N, 1)
            r = pl.reciprocal(denom, approx=True)                       # EUP slot
            r = r * (2.0 - denom * r)                                   # one NR step
            aggs.append(u[:, hd * d:(hd + 1) * d] * r)

        # Concat heads once -> single wide head-mixing matmul (bias pre-fused).
        agg = jnp.concatenate(aggs, axis=-1)                            # (N, H*D)
        h = jnp.dot(agg, lw, preferred_element_type=jnp.float32) + lb
        if li != num_layers - 1:
            h = jnp.maximum(h, 0.0)     # ReLU; Dropout(0.1) == identity (eval)

    out_ref[...] = h


# ----------------------------------------------------------------------------
# Host-side parameter prep / packing
# ----------------------------------------------------------------------------
def _round_up(x, m):
    return (x + m - 1) // m * m


def _block_diag(a):
    """(H, D) per-head attention vectors -> (H, H*D) block-diagonal score matrix."""
    h, d = a.shape
    out = np.zeros((h, h * d), a.dtype)
    for i in range(h):
        out[i, i * d:(i + 1) * d] = a[i]
    return out


def pack_gat_params(params):
    """Pack all layers' parameters into ONE flat (rows, width) f32 buffer.

    Per layer: w (F_in, H*D), block-diag al/ar (H, H*D), lw (H*D, F_out),
    lb_fused (1, F_out) with the GATConv bias folded in.  Row offsets are
    8-aligned so every in-kernel slice is sublane-aligned.
    Returns (packed_buffer, layer_meta) where layer_meta is a static tuple of
    (f_in, hd_tot, d, f_out, ow, oal, oar, olw, olb) per layer.
    """
    blocks, meta = [], []
    row, width = 0, 0

    def add(arr):
        nonlocal row, width
        arr = np.asarray(arr, np.float32)
        off = row
        blocks.append((off, arr))
        width = max(width, arr.shape[1])
        row = _round_up(off + arr.shape[0], 8)
        return off

    for (w, al, ar, b, lw, lb) in params:
        w_np, al_np, ar_np = np.asarray(w, np.float32), np.asarray(al, np.float32), np.asarray(ar, np.float32)
        b_np, lw_np, lb_np = np.asarray(b, np.float32), np.asarray(lw, np.float32), np.asarray(lb, np.float32)
        f_in, hd_tot = w_np.shape
        heads, d = al_np.shape
        f_out = lw_np.shape[1]
        # concat(agg_h + b_h) @ lw + lb == concat(agg_h) @ lw + (b_flat @ lw + lb)
        lb_fused = lb_np + b_np.reshape(1, heads * d) @ lw_np
        offs = (add(w_np), add(_block_diag(al_np)), add(_block_diag(ar_np)),
                add(lw_np), add(lb_fused))
        meta.append((f_in, hd_tot, d, f_out) + offs)

    buf = np.zeros((_round_up(row, 8), width), np.float32)
    for off, arr in blocks:
        buf[off:off + arr.shape[0], :arr.shape[1]] = arr
    return jnp.asarray(buf), tuple(meta)


def gat_forward(h, adj, packed, *, layer_meta, heads, neg_slope=0.2):
    """Full GAT forward: ALL layers fused into one pallas_call; 3 operands total."""
    n = h.shape[0]
    f_out = layer_meta[-1][3]
    kern = functools.partial(fused_gat_kernel, layer_meta=layer_meta,
                             heads=heads, neg_slope=neg_slope)
    vmem = pl.BlockSpec(memory_space=pltpu.MemorySpace.VMEM)
    return pl.pallas_call(
        kern,
        out_shape=jax.ShapeDtypeStruct((n, f_out), jnp.float32),
        in_specs=[vmem, vmem, vmem],
        out_specs=vmem,
        compiler_params=pltpu.CompilerParams(
            vmem_limit_bytes=32 * 1024 * 1024),
    )(h, adj, packed)


# ----------------------------------------------------------------------------
# Pure-JAX reference (DGL GATConv + Linear semantics)
# ----------------------------------------------------------------------------
def reference_forward(h, adj, params):
    for i, (w, al, ar, b, lw, lb) in enumerate(params):
        heads, dout = al.shape
        z = h @ w                                          # (N, H*D)
        zh = z.reshape(-1, heads, dout)
        el = jnp.sum(zh * al[None], axis=-1)               # (N, H)
        er = jnp.sum(zh * ar[None], axis=-1)               # (N, H)
        e = er[:, None, :] + el[None, :, :]                # (Nd, Ns, H)
        e = jnp.where(e > 0, e, 0.2 * e)
        e = jnp.where(adj[:, :, None] > 0, e, -1e30)
        e = e - e.max(axis=1, keepdims=True)
        p = jnp.exp(e) * adj[:, :, None]
        alpha = p / p.sum(axis=1, keepdims=True)
        agg = jnp.einsum('dsh,shf->dhf', alpha, zh) + b[None]
        flat = agg.reshape(-1, heads * dout)
        h = flat @ lw + lb
        if i != len(params) - 1:
            h = jnp.maximum(h, 0.0)
    return h


def make_layer_params(key, f_in, f_gat, f_lin_out, heads):
    ks = jax.random.split(key, 6)
    scale = 0.1
    w = scale * jax.random.normal(ks[0], (f_in, heads * f_gat), jnp.float32)
    al = scale * jax.random.normal(ks[1], (heads, f_gat), jnp.float32)
    ar = scale * jax.random.normal(ks[2], (heads, f_gat), jnp.float32)
    b = scale * jax.random.normal(ks[3], (heads, f_gat), jnp.float32)
    lw = scale * jax.random.normal(ks[4], (heads * f_gat, f_lin_out), jnp.float32)
    lb = scale * jax.random.normal(ks[5], (1, f_lin_out), jnp.float32)
    return (w, al, ar, b, lw, lb)


if __name__ == "__main__":
    # Small, module-consistent config: in_size=16, hid_size=32, out_size=8,
    # num_layers=2, num_heads=2, N=32 graph nodes.
    N, in_size, hid_size, out_size, heads = 32, 16, 32, 8, 2

    key = jax.random.PRNGKey(0)
    k_feat, k_adj, k_p0, k_p1 = jax.random.split(key, 4)

    h0 = jax.random.normal(k_feat, (N, in_size), jnp.float32)
    # Random sparse-ish directed adjacency with self-loops (every dst has >=1 edge).
    adj = (jax.random.uniform(k_adj, (N, N)) < 0.2).astype(jnp.float32)
    adj = jnp.maximum(adj, jnp.eye(N, dtype=jnp.float32))

    params = [
        make_layer_params(k_p0, in_size, hid_size, hid_size, heads),   # layer 0
        make_layer_params(k_p1, hid_size, out_size, out_size, heads),  # layer 1
    ]

    packed, meta = pack_gat_params(params)
    fwd = jax.jit(functools.partial(gat_forward, layer_meta=meta, heads=heads))
    out = jax.block_until_ready(fwd(h0, adj, packed))

    ref = reference_forward(h0, adj, params)
    np.testing.assert_allclose(np.asarray(out), np.asarray(ref),
                               rtol=1e-4, atol=1e-4)
    assert out.shape == (N, out_size)

    print("KERNEL_OK")
</pallas_src>

<mosaic_0001>
module attributes {stable_mosaic.version = 11 : i64} {
  func.func @fused_gat_kernel(%arg0: memref<32x16xf32, #tpu.memory_space<vmem>>, %arg1: memref<32x32xf32, #tpu.memory_space<vmem>>, %arg2: memref<176x64xf32, #tpu.memory_space<vmem>>, %arg3: memref<32x8xf32, #tpu.memory_space<vmem>>) attributes {dimension_semantics = [], scalar_prefetch = 0 : i64, scratch_operands = 0 : i64, tpu.core_type = #tpu.core_type<tc>} {
    %c0 = arith.constant 0 : index
    %c0_0 = arith.constant 0 : index
    %0 = vector.load %arg1[%c0, %c0_0] : memref<32x32xf32, #tpu.memory_space<vmem>>, vector<32x32xf32>
    %cst = arith.constant 1.000000e+00 : f32
    %1 = vector.broadcast %cst : f32 to vector<32x32xf32>
    %2 = arith.subf %0, %1 : vector<32x32xf32>
    %cst_1 = arith.constant 1.000000e+30 : f32
    %3 = vector.broadcast %cst_1 : f32 to vector<32x32xf32>
    %4 = arith.mulf %2, %3 : vector<32x32xf32>
    %cst_2 = arith.constant 1.000000e+00 : f32
    %5 = vector.broadcast %cst_2 : f32 to vector<32x1xf32>
    %c0_3 = arith.constant 0 : index
    %c0_4 = arith.constant 0 : index
    %6 = vector.load %arg0[%c0_3, %c0_4] : memref<32x16xf32, #tpu.memory_space<vmem>>, vector<32x16xf32>
    %c0_5 = arith.constant 0 : index
    %c0_6 = arith.constant 0 : index
    %7 = vector.load %arg2[%c0_5, %c0_6] : memref<176x64xf32, #tpu.memory_space<vmem>>, vector<16x64xf32>
    %c16 = arith.constant 16 : index
    %c0_7 = arith.constant 0 : index
    %8 = vector.load %arg2[%c16, %c0_7] : memref<176x64xf32, #tpu.memory_space<vmem>>, vector<2x64xf32>
    %c24 = arith.constant 24 : index
    %c0_8 = arith.constant 0 : index
    %9 = vector.load %arg2[%c24, %c0_8] : memref<176x64xf32, #tpu.memory_space<vmem>>, vector<2x64xf32>
    %c32 = arith.constant 32 : index
    %c0_9 = arith.constant 0 : index
    %10 = vector.load %arg2[%c32, %c0_9] : memref<176x64xf32, #tpu.memory_space<vmem>>, vector<64x32xf32>
    %c96 = arith.constant 96 : index
    %c0_10 = arith.constant 0 : index
    %11 = vector.load %arg2[%c96, %c0_10] : memref<176x64xf32, #tpu.memory_space<vmem>>, vector<1x32xf32>
    %cst_11 = arith.constant dense<0.000000e+00> : vector<32x64xf32>
    %12 = tpu.matmul %6, %7, %cst_11 {dimension_numbers = #tpu.dot_dimension_numbers<[1], [0], [0], [1], [0, 0, 1, 1], [], []>} : vector<32x16xf32>, vector<16x64xf32>, vector<32x64xf32> -> vector<32x64xf32>
    %cst_12 = arith.constant dense<0.000000e+00> : vector<2x32xf32>
    %13 = tpu.matmul %8, %12, %cst_12 {dimension_numbers = #tpu.dot_dimension_numbers<[1], [1], [0], [0], [0, 0, 1, 0], [], []>} : vector<2x64xf32>, vector<32x64xf32>, vector<2x32xf32> -> vector<2x32xf32>
    %cst_13 = arith.constant dense<0.000000e+00> : vector<32x2xf32>
    %14 = tpu.matmul %12, %9, %cst_13 {dimension_numbers = #tpu.dot_dimension_numbers<[1], [1], [0], [0], [0, 0, 1, 0], [], []>} : vector<32x64xf32>, vector<2x64xf32>, vector<32x2xf32> -> vector<32x2xf32>
    %15 = tpu.concatenate %12, %5 in 1 : vector<32x64xf32>, vector<32x1xf32> -> vector<32x65xf32>
    %16 = vector.extract_strided_slice %14 {offsets = [0, 0], sizes = [32, 1], strides = [1, 1]} : vector<32x2xf32> to vector<32x1xf32>
    %17 = vector.extract_strided_slice %13 {offsets = [0, 0], sizes = [1, 32], strides = [1, 1]} : vector<2x32xf32> to vector<1x32xf32>
    %18 = vector.broadcast %16 : vector<32x1xf32> to vector<32x32xf32>
    %19 = vector.broadcast %17 : vector<1x32xf32> to vector<32x32xf32>
    %20 = arith.addf %18, %19 : vector<32x32xf32>
    %cst_14 = arith.constant 2.000000e-01 : f32
    %21 = vector.broadcast %cst_14 : f32 to vector<32x32xf32>
    %22 = arith.mulf %21, %20 : vector<32x32xf32>
    %23 = arith.maximumf %20, %22 : vector<32x32xf32>
    %24 = arith.addf %23, %4 : vector<32x32xf32>
    %cst_15 = arith.constant dense<0xFF800000> : vector<32xf32>
    %25 = vector.multi_reduction <maximumf>, %24, %cst_15 [1] : vector<32x32xf32> to vector<32xf32>
    %26 = vector.shape_cast %25 : vector<32xf32> to vector<32x1xf32>
    %27 = vector.broadcast %26 : vector<32x1xf32> to vector<32x32xf32>
    %28 = arith.subf %24, %27 : vector<32x32xf32>
    %29 = math.exp %28 : vector<32x32xf32>
    %cst_16 = arith.constant dense<0.000000e+00> : vector<32x65xf32>
    %30 = tpu.matmul %29, %15, %cst_16 {dimension_numbers = #tpu.dot_dimension_numbers<[1], [0], [0], [1], [0, 0, 1, 1], [], []>} : vector<32x32xf32>, vector<32x65xf32>, vector<32x65xf32> -> vector<32x65xf32>
    %31 = vector.extract_strided_slice %30 {offsets = [0, 64], sizes = [32, 1], strides = [1, 1]} : vector<32x65xf32> to vector<32x1xf32>
    %cst_17 = arith.constant 1.000000e-30 : f32
    %32 = vector.broadcast %cst_17 : f32 to vector<32x1xf32>
    %33 = arith.maximumf %31, %32 : vector<32x1xf32>
    %34 = tpu.reciprocal %33 {approx = true} : vector<32x1xf32> -> vector<32x1xf32>
    %35 = arith.mulf %33, %34 : vector<32x1xf32>
    %cst_18 = arith.constant 2.000000e+00 : f32
    %36 = vector.broadcast %cst_18 : f32 to vector<32x1xf32>
    %37 = arith.subf %36, %35 : vector<32x1xf32>
    %38 = arith.mulf %34, %37 : vector<32x1xf32>
    %39 = vector.extract_strided_slice %30 {offsets = [0, 0], sizes = [32, 32], strides = [1, 1]} : vector<32x65xf32> to vector<32x32xf32>
    %40 = vector.broadcast %38 : vector<32x1xf32> to vector<32x32xf32>
    %41 = arith.mulf %39, %40 : vector<32x32xf32>
    %42 = vector.extract_strided_slice %14 {offsets = [0, 1], sizes = [32, 1], strides = [1, 1]} : vector<32x2xf32> to vector<32x1xf32>
    %43 = vector.extract_strided_slice %13 {offsets = [1, 0], sizes = [1, 32], strides = [1, 1]} : vector<2x32xf32> to vector<1x32xf32>
    %44 = vector.broadcast %42 : vector<32x1xf32> to vector<32x32xf32>
    %45 = vector.broadcast %43 : vector<1x32xf32> to vector<32x32xf32>
    %46 = arith.addf %44, %45 : vector<32x32xf32>
    %cst_19 = arith.constant 2.000000e-01 : f32
    %47 = vector.broadcast %cst_19 : f32 to vector<32x32xf32>
    %48 = arith.mulf %47, %46 : vector<32x32xf32>
    %49 = arith.maximumf %46, %48 : vector<32x32xf32>
    %50 = arith.addf %49, %4 : vector<32x32xf32>
    %cst_20 = arith.constant dense<0xFF800000> : vector<32xf32>
    %51 = vector.multi_reduction <maximumf>, %50, %cst_20 [1] : vector<32x32xf32> to vector<32xf32>
    %52 = vector.shape_cast %51 : vector<32xf32> to vector<32x1xf32>
    %53 = vector.broadcast %52 : vector<32x1xf32> to vector<32x32xf32>
    %54 = arith.subf %50, %53 : vector<32x32xf32>
    %55 = math.exp %54 : vector<32x32xf32>
    %cst_21 = arith.constant dense<0.000000e+00> : vector<32x65xf32>
    %56 = tpu.matmul %55, %15, %cst_21 {dimension_numbers = #tpu.dot_dimension_numbers<[1], [0], [0], [1], [0, 0, 1, 1], [], []>} : vector<32x32xf32>, vector<32x65xf32>, vector<32x65xf32> -> vector<32x65xf32>
    %57 = vector.extract_strided_slice %56 {offsets = [0, 64], sizes = [32, 1], strides = [1, 1]} : vector<32x65xf32> to vector<32x1xf32>
    %cst_22 = arith.constant 1.000000e-30 : f32
    %58 = vector.broadcast %cst_22 : f32 to vector<32x1xf32>
    %59 = arith.maximumf %57, %58 : vector<32x1xf32>
    %60 = tpu.reciprocal %59 {approx = true} : vector<32x1xf32> -> vector<32x1xf32>
    %61 = arith.mulf %59, %60 : vector<32x1xf32>
    %cst_23 = arith.constant 2.000000e+00 : f32
    %62 = vector.broadcast %cst_23 : f32 to vector<32x1xf32>
    %63 = arith.subf %62, %61 : vector<32x1xf32>
    %64 = arith.mulf %60, %63 : vector<32x1xf32>
    %65 = vector.extract_strided_slice %56 {offsets = [0, 32], sizes = [32, 32], strides = [1, 1]} : vector<32x65xf32> to vector<32x32xf32>
    %66 = vector.broadcast %64 : vector<32x1xf32> to vector<32x32xf32>
    %67 = arith.mulf %65, %66 : vector<32x32xf32>
    %68 = tpu.concatenate %41, %67 in 1 : vector<32x32xf32>, vector<32x32xf32> -> vector<32x64xf32>
    %cst_24 = arith.constant dense<0.000000e+00> : vector<32x32xf32>
    %69 = tpu.matmul %68, %10, %cst_24 {dimension_numbers = #tpu.dot_dimension_numbers<[1], [0], [0], [1], [0, 0, 1, 1], [], []>} : vector<32x64xf32>, vector<64x32xf32>, vector<32x32xf32> -> vector<32x32xf32>
    %70 = vector.broadcast %11 : vector<1x32xf32> to vector<32x32xf32>
    %71 = arith.addf %69, %70 : vector<32x32xf32>
    %cst_25 = arith.constant 0.000000e+00 : f32
    %72 = vector.broadcast %cst_25 : f32 to vector<32x32xf32>
    %73 = arith.maximumf %71, %72 : vector<32x32xf32>
    %c104 = arith.constant 104 : index
    %c0_26 = arith.constant 0 : index
    %74 = vector.load %arg2[%c104, %c0_26] : memref<176x64xf32, #tpu.memory_space<vmem>>, vector<32x16xf32>
    %c136 = arith.constant 136 : index
    %c0_27 = arith.constant 0 : index
    %75 = vector.load %arg2[%c136, %c0_27] : memref<176x64xf32, #tpu.memory_space<vmem>>, vector<2x16xf32>
    %c144 = arith.constant 144 : index
    %c0_28 = arith.constant 0 : index
    %76 = vector.load %arg2[%c144, %c0_28] : memref<176x64xf32, #tpu.memory_space<vmem>>, vector<2x16xf32>
    %c152 = arith.constant 152 : index
    %c0_29 = arith.constant 0 : index
    %77 = vector.load %arg2[%c152, %c0_29] : memref<176x64xf32, #tpu.memory_space<vmem>>, vector<16x8xf32>
    %c168 = arith.constant 168 : index
    %c0_30 = arith.constant 0 : index
    %78 = vector.load %arg2[%c168, %c0_30] : memref<176x64xf32, #tpu.memory_space<vmem>>, vector<1x8xf32>
    %cst_31 = arith.constant dense<0.000000e+00> : vector<32x16xf32>
    %79 = tpu.matmul %73, %74, %cst_31 {dimension_numbers = #tpu.dot_dimension_numbers<[1], [0], [0], [1], [0, 0, 1, 1], [], []>} : vector<32x32xf32>, vector<32x16xf32>, vector<32x16xf32> -> vector<32x16xf32>
    %cst_32 = arith.constant dense<0.000000e+00> : vector<2x32xf32>
    %80 = tpu.matmul %75, %79, %cst_32 {dimension_numbers = #tpu.dot_dimension_numbers<[1], [1], [0], [0], [0, 0, 1, 0], [], []>} : vector<2x16xf32>, vector<32x16xf32>, vector<2x32xf32> -> vector<2x32xf32>
    %cst_33 = arith.constant dense<0.000000e+00> : vector<32x2xf32>
    %81 = tpu.matmul %79, %76, %cst_33 {dimension_numbers = #tpu.dot_dimension_numbers<[1], [1], [0], [0], [0, 0, 1, 0], [], []>} : vector<32x16xf32>, vector<2x16xf32>, vector<32x2xf32> -> vector<32x2xf32>
    %82 = tpu.concatenate %79, %5 in 1 : vector<32x16xf32>, vector<32x1xf32> -> vector<32x17xf32>
    %83 = vector.extract_strided_slice %81 {offsets = [0, 0], sizes = [32, 1], strides = [1, 1]} : vector<32x2xf32> to vector<32x1xf32>
    %84 = vector.extract_strided_slice %80 {offsets = [0, 0], sizes = [1, 32], strides = [1, 1]} : vector<2x32xf32> to vector<1x32xf32>
    %85 = vector.broadcast %83 : vector<32x1xf32> to vector<32x32xf32>
    %86 = vector.broadcast %84 : vector<1x32xf32> to vector<32x32xf32>
    %87 = arith.addf %85, %86 : vector<32x32xf32>
    %cst_34 = arith.constant 2.000000e-01 : f32
    %88 = vector.broadcast %cst_34 : f32 to vector<32x32xf32>
    %89 = arith.mulf %88, %87 : vector<32x32xf32>
    %90 = arith.maximumf %87, %89 : vector<32x32xf32>
    %91 = arith.addf %90, %4 : vector<32x32xf32>
    %cst_35 = arith.constant dense<0xFF800000> : vector<32xf32>
    %92 = vector.multi_reduction <maximumf>, %91, %cst_35 [1] : vector<32x32xf32> to vector<32xf32>
    %93 = vector.shape_cast %92 : vector<32xf32> to vector<32x1xf32>
    %94 = vector.broadcast %93 : vector<32x1xf32> to vector<32x32xf32>
    %95 = arith.subf %91, %94 : vector<32x32xf32>
    %96 = math.exp %95 : vector<32x32xf32>
    %cst_36 = arith.constant dense<0.000000e+00> : vector<32x17xf32>
    %97 = tpu.matmul %96, %82, %cst_36 {dimension_numbers = #tpu.dot_dimension_numbers<[1], [0], [0], [1], [0, 0, 1, 1], [], []>} : vector<32x32xf32>, vector<32x17xf32>, vector<32x17xf32> -> vector<32x17xf32>
    %98 = vector.extract_strided_slice %97 {offsets = [0, 16], sizes = [32, 1], strides = [1, 1]} : vector<32x17xf32> to vector<32x1xf32>
    %cst_37 = arith.constant 1.000000e-30 : f32
    %99 = vector.broadcast %cst_37 : f32 to vector<32x1xf32>
    %100 = arith.maximumf %98, %99 : vector<32x1xf32>
    %101 = tpu.reciprocal %100 {approx = true} : vector<32x1xf32> -> vector<32x1xf32>
    %102 = arith.mulf %100, %101 : vector<32x1xf32>
    %cst_38 = arith.constant 2.000000e+00 : f32
    %103 = vector.broadcast %cst_38 : f32 to vector<32x1xf32>
    %104 = arith.subf %103, %102 : vector<32x1xf32>
    %105 = arith.mulf %101, %104 : vector<32x1xf32>
    %106 = vector.extract_strided_slice %97 {offsets = [0, 0], sizes = [32, 8], strides = [1, 1]} : vector<32x17xf32> to vector<32x8xf32>
    %107 = vector.broadcast %105 : vector<32x1xf32> to vector<32x8xf32>
    %108 = arith.mulf %106, %107 : vector<32x8xf32>
    %109 = vector.extract_strided_slice %81 {offsets = [0, 1], sizes = [32, 1], strides = [1, 1]} : vector<32x2xf32> to vector<32x1xf32>
    %110 = vector.extract_strided_slice %80 {offsets = [1, 0], sizes = [1, 32], strides = [1, 1]} : vector<2x32xf32> to vector<1x32xf32>
    %111 = vector.broadcast %109 : vector<32x1xf32> to vector<32x32xf32>
    %112 = vector.broadcast %110 : vector<1x32xf32> to vector<32x32xf32>
    %113 = arith.addf %111, %112 : vector<32x32xf32>
    %cst_39 = arith.constant 2.000000e-01 : f32
    %114 = vector.broadcast %cst_39 : f32 to vector<32x32xf32>
    %115 = arith.mulf %114, %113 : vector<32x32xf32>
    %116 = arith.maximumf %113, %115 : vector<32x32xf32>
    %117 = arith.addf %116, %4 : vector<32x32xf32>
    %cst_40 = arith.constant dense<0xFF800000> : vector<32xf32>
    %118 = vector.multi_reduction <maximumf>, %117, %cst_40 [1] : vector<32x32xf32> to vector<32xf32>
    %119 = vector.shape_cast %118 : vector<32xf32> to vector<32x1xf32>
    %120 = vector.broadcast %119 : vector<32x1xf32> to vector<32x32xf32>
    %121 = arith.subf %117, %120 : vector<32x32xf32>
    %122 = math.exp %121 : vector<32x32xf32>
    %cst_41 = arith.constant dense<0.000000e+00> : vector<32x17xf32>
    %123 = tpu.matmul %122, %82, %cst_41 {dimension_numbers = #tpu.dot_dimension_numbers<[1], [0], [0], [1], [0, 0, 1, 1], [], []>} : vector<32x32xf32>, vector<32x17xf32>, vector<32x17xf32> -> vector<32x17xf32>
    %124 = vector.extract_strided_slice %123 {offsets = [0, 16], sizes = [32, 1], strides = [1, 1]} : vector<32x17xf32> to vector<32x1xf32>
    %cst_42 = arith.constant 1.000000e-30 : f32
    %125 = vector.broadcast %cst_42 : f32 to vector<32x1xf32>
    %126 = arith.maximumf %124, %125 : vector<32x1xf32>
    %127 = tpu.reciprocal %126 {approx = true} : vector<32x1xf32> -> vector<32x1xf32>
    %128 = arith.mulf %126, %127 : vector<32x1xf32>
    %cst_43 = arith.constant 2.000000e+00 : f32
    %129 = vector.broadcast %cst_43 : f32 to vector<32x1xf32>
    %130 = arith.subf %129, %128 : vector<32x1xf32>
    %131 = arith.mulf %127, %130 : vector<32x1xf32>
    %132 = vector.extract_strided_slice %123 {offsets = [0, 8], sizes = [32, 8], strides = [1, 1]} : vector<32x17xf32> to vector<32x8xf32>
    %133 = vector.broadcast %131 : vector<32x1xf32> to vector<32x8xf32>
    %134 = arith.mulf %132, %133 : vector<32x8xf32>
    %135 = tpu.concatenate %108, %134 in 1 : vector<32x8xf32>, vector<32x8xf32> -> vector<32x16xf32>
    %cst_44 = arith.constant dense<0.000000e+00> : vector<32x8xf32>
    %136 = tpu.matmul %135, %77, %cst_44 {dimension_numbers = #tpu.dot_dimension_numbers<[1], [0], [0], [1], [0, 0, 1, 1], [], []>} : vector<32x16xf32>, vector<16x8xf32>, vector<32x8xf32> -> vector<32x8xf32>
    %137 = vector.broadcast %78 : vector<1x8xf32> to vector<32x8xf32>
    %138 = arith.addf %136, %137 : vector<32x8xf32>
    %c0_45 = arith.constant 0 : index
    %c0_46 = arith.constant 0 : index
    %139 = vector.load %arg3[%c0_45, %c0_46] : memref<32x8xf32, #tpu.memory_space<vmem>>, vector<32x8xf32>
    tpu.vector_store %arg3[%c0_45, %c0_46], %138 {strides = array<i32>} : memref<32x8xf32, #tpu.memory_space<vmem>>, vector<32x8xf32>,
    return
  }
}

</mosaic_0001>

<llo_original>
// kernel: gat_forward.1
$region0: #{gat_forward.1}
  #allocation0 [shape = 'u32[]', space=smem, size = 0x4, offset = 0x4, fixed_abs, tag = 'smem constant byte address 0x4 - core index']
  #allocation1 [shape = 'u32[144,128]{1,0:T(1,128)}', space=vmem, size = 0x12000, scoped, tag = 'internal scratch']
  %s0 = inlined_call_operand.vmem [shape: f32[32,16], index: 0, kind: input, shape index: {}]
  %s1 = inlined_call_operand.vmem [shape: f32[32,32], index: 1, kind: input, shape index: {}]
  %s2 = inlined_call_operand.vmem [shape: f32[176,64], index: 2, kind: input, shape index: {}]
  %s3 = inlined_call_operand.vmem [shape: f32[32,8], index: 3, kind: output, shape index: {}]
  %s4 = sld [smem:[#allocation0]]
  $region22: #{gat_forward.1} parent=0
    _
  %s6 = ssub.s32 1, %s4
  %s7 = scalar_select 0, %s6, %s4
  // Predicated region
  $region2: #{gat_forward.1} parent=0 // pred_check
    _
  $region3: #{gat_forward.1} parent=0 // pred_check_branch
    %9 = sbr.rel (0) target = $region5
  $region4: #{gat_forward.1} parent=0 // pred_region
    _
  $region5: #{gat_forward.1} parent=0 // pred_fallthru
    _
  // Predicated region
  $region6: #{gat_forward.1} parent=0 // pred_check
    _
  $region7: #{gat_forward.1} parent=0 // pred_check_branch
    %11 = sbr.rel (0) target = $region9
  $region8: #{gat_forward.1} parent=0 // pred_region
    _
  $region9: #{gat_forward.1} parent=0 // pred_fallthru
    _
  // Predicated region
  $region10: #{gat_forward.1} parent=0 // pred_check
    _
  $region11: #{gat_forward.1} parent=0 // pred_check_branch
    %13 = sbr.rel (0) target = $region13
  $region12: #{gat_forward.1} parent=0 // pred_region
    _
  $region13: #{gat_forward.1} parent=0 // pred_fallthru
    _
  %v14 = vld [vmem:[%s1] sm:$0xff]
  %v15 = vld [vmem:[%s1 + $0x8] sm:$0xff]
  %v16 = vld [vmem:[%s1 + $0x10] sm:$0xff]
  %v17 = vld [vmem:[%s1 + $0x18] sm:$0xff]
  %v18 = vsub.f32 %v14, 1.0
  %v19 = vsub.f32 %v15, 1.0
  %v20 = vsub.f32 %v16, 1.0
  %v21 = vsub.f32 %v17, 1.0
  %v22 = vmul.f32 %v18, 1e+30
  %v23 = vmul.f32 %v19, 1e+30
  %v24 = vmul.f32 %v20, 1e+30
  %v25 = vmul.f32 %v21, 1e+30
  %v26 = vld [vmem:[%s0] sm:$0xff]
  %v27 = vld [vmem:[%s0 + $0x8] sm:$0xff]
  %v28 = vld [vmem:[%s0 + $0x10] sm:$0xff]
  %v29 = vld [vmem:[%s0 + $0x18] sm:$0xff]
  %v30 = vld [vmem:[%s2] sm:$0xff]
  %v31 = vld [vmem:[%s2 + $0x8] sm:$0xff]
  %v32 = vld [vmem:[%s2 + $0x10] sm:$0x3]
  %v33 = vld [vmem:[%s2 + $0x18] sm:$0x3]
  %v34 = vld [vmem:[%s2 + $0x20] sm:$0xff]
  %v35 = vld [vmem:[%s2 + $0x28] sm:$0xff]
  %v36 = vld [vmem:[%s2 + $0x30] sm:$0xff]
  %v37 = vld [vmem:[%s2 + $0x38] sm:$0xff]
  %v38 = vld [vmem:[%s2 + $0x40] sm:$0xff]
  %v39 = vld [vmem:[%s2 + $0x48] sm:$0xff]
  %v40 = vld [vmem:[%s2 + $0x50] sm:$0xff]
  %v41 = vld [vmem:[%s2 + $0x58] sm:$0xff]
  %v42 = vld [vmem:[%s2 + $0x60] sm:$0x1]
  %vm43 = vcmask 130048
  %v45 = vsel %vm43, %v26, 0
  %v48 = vsel %vm43, %v27, 0
  %v51 = vsel %vm43, %v28, 0
  %v54 = vsel %vm43, %v29, 0
  %56 = vmatprep.subr.mxu0 0.0
  %57 = vmatpush1.msra.mxu0 %v30
  %58 = vmatprep.subr.mxu0 0.0
  %59 = vmatpush1.msra.mxu0 %v31
  %60 = vmatprep.subr.mxu0 0.0
  %61 = vmatpush1.msra.mxu0 0.0
  %62 = vmatprep.subr.mxu0 0.0
  %63 = vmatpush1.msra.mxu0 0.0
  %64 = vmatprep.subr.mxu0 0.0
  %65 = vmatpush1.msra.mxu0 0.0
  %66 = vmatprep.subr.mxu0 0.0
  %67 = vmatpush1.msra.mxu0 0.0
  %68 = vmatprep.subr.mxu0 0.0
  %69 = vmatpush1.msra.mxu0 0.0
  %70 = vmatprep.subr.mxu0 0.0
  %71 = vmatpush1.msra.mxu0 0.0
  %72 = vmatprep.subr.mxu0 0.0
  %73 = vmatpush1.msra.mxu0 0.0
  %74 = vmatprep.subr.mxu0 0.0
  %75 = vmatpush1.msra.mxu0 0.0
  %76 = vmatprep.subr.mxu0 0.0
  %77 = vmatpush1.msra.mxu0 0.0
  %78 = vmatprep.subr.mxu0 0.0
  %79 = vmatpush1.msra.mxu0 0.0
  %80 = vmatprep.subr.mxu0 0.0
  %81 = vmatpush1.msra.mxu0 0.0
  %82 = vmatprep.subr.mxu0 0.0
  %83 = vmatpush1.msra.mxu0 0.0
  %84 = vmatprep.subr.mxu0 0.0
  %85 = vmatpush1.msra.mxu0 0.0
  %86 = vmatprep.subr.mxu0 0.0
  %87 = vmatpush1.msra.mxu0 0.0
  %88 = vmatprep.subr.mxu0 0.0
  %89 = vmatpush1.msra.mxu0 0.0
  %90 = vmatprep.subr.mxu0 0.0
  %91 = vmatpush1.msra.mxu0 0.0
  %92 = vmatprep.subr.mxu0 0.0
  %93 = vmatpush1.msra.mxu0 0.0
  %94 = vmatprep.subr.mxu0 0.0
  %95 = vmatpush1.msra.mxu0 0.0
  %96 = vmatprep.subr.mxu0 0.0
  %97 = vmatpush1.msra.mxu0 0.0
  %98 = vmatprep.subr.mxu0 0.0
  %99 = vmatpush1.msra.mxu0 0.0
  %100 = vmatprep.subr.mxu0 0.0
  %101 = vmatpush1.msra.mxu0 0.0
  %102 = vmatprep.subr.mxu0 0.0
  %103 = vmatpush1.msra.mxu0 0.0
  %104 = vmatprep.subr.mxu0 0.0
  %105 = vmatpush1.msra.mxu0 0.0
  %106 = vmatprep.subr.mxu0 0.0
  %107 = vmatpush1.msra.mxu0 0.0
  %108 = vmatprep.subr.mxu0 0.0
  %109 = vmatpush1.msra.mxu0 0.0
  %110 = vmatprep.subr.mxu0 0.0
  %111 = vmatpush1.msra.mxu0 0.0
  %112 = vmatprep.subr.mxu0 0.0
  %113 = vmatpush1.msra.mxu0 0.0
  %114 = vmatprep.subr.mxu0 0.0
  %115 = vmatpush1.msra.mxu0 0.0
  %116 = vmatprep.subr.mxu0 0.0
  %117 = vmatpush1.msra.mxu0 0.0
  %118 = vmatprep.subr.mxu0 0.0
  %119 = vmatpush1.msra.mxu0 0.0
  %120 = vmatprep.mubr.f32.mxu0 0.0
  %121 = vmatmul.mubr.f32.gmra.mrb[0].mxu0 %v45
  %v122 = vpop.f32.mrb[0].mxu0
  %v123 = vadd.f32 0.0, %v122
  %v124 = vpop.f32.mrb[0].mxu0
  %125 = vmatprep.mubr.f32.mxu0 0.0
  %126 = vmatmul.mubr.f32.gmra.mrb[0].mxu0 %v48
  %v127 = vpop.f32.mrb[0].mxu0
  %v128 = vadd.f32 0.0, %v127
  %v129 = vpop.f32.mrb[0].mxu0
  %130 = vmatprep.mubr.f32.mxu0 0.0
  %131 = vmatmul.mubr.f32.gmra.mrb[0].mxu0 %v51
  %v132 = vpop.f32.mrb[0].mxu0
  %v133 = vadd.f32 0.0, %v132
  %v134 = vpop.f32.mrb[0].mxu0
  %135 = vmatprep.mubr.f32.mxu0 0.0
  %136 = vmatmul.mubr.f32.gmra.mrb[0].mxu0 %v54
  %v137 = vpop.f32.mrb[0].mxu0
  %v138 = vadd.f32 0.0, %v137
  %v139 = vpop.f32.mrb[0].mxu0
  %140 = vdwg.mxu0
  %vm141 = vcmask 523264
  %v143 = vsel %vm141, %v32, 0
  %v146 = vsel %vm141, %v123, 0
  %v149 = vsel %vm141, %v128, 0
  %v152 = vsel %vm141, %v133, 0
  %v155 = vsel %vm141, %v138, 0
  %157 = vmatprep.subr.mxu0 0.0
  %158 = vmatpush1.xpose.msra.mxu0 %v146
  %159 = vmatprep.subr.mxu0 0.0
  %160 = vmatpush1.xpose.msra.mxu0 %v149
  %161 = vmatprep.subr.mxu0 0.0
  %162 = vmatpush1.xpose.msra.mxu0 %v152
  %163 = vmatprep.subr.mxu0 0.0
  %164 = vmatpush1.xpose.msra.mxu0 %v155
  %165 = vmatprep.subr.mxu0 0.0
  %166 = vmatpush1.xpose.msra.mxu0 0.0
  %167 = vmatprep.subr.mxu0 0.0
  %168 = vmatpush1.xpose.msra.mxu0 0.0
  %169 = vmatprep.subr.mxu0 0.0
  %170 = vmatpush1.xpose.msra.mxu0 0.0
  %171 = vmatprep.subr.mxu0 0.0
  %172 = vmatpush1.xpose.msra.mxu0 0.0
  %173 = vmatprep.subr.mxu0 0.0
  %174 = vmatpush1.xpose.msra.mxu0 0.0
  %175 = vmatprep.subr.mxu0 0.0
  %176 = vmatpush1.xpose.msra.mxu0 0.0
  %177 = vmatprep.subr.mxu0 0.0
  %178 = vmatpush1.xpose.msra.mxu0 0.0
  %179 = vmatprep.subr.mxu0 0.0
  %180 = vmatpush1.xpose.msra.mxu0 0.0
  %181 = vmatprep.subr.mxu0 0.0
  %182 = vmatpush1.xpose.msra.mxu0 0.0
  %183 = vmatprep.subr.mxu0 0.0
  %184 = vmatpush1.xpose.msra.mxu0 0.0
  %185 = vmatprep.subr.mxu0 0.0
  %186 = vmatpush1.xpose.msra.mxu0 0.0
  %187 = vmatprep.subr.mxu0 0.0
  %188 = vmatpush1.xpose.msra.mxu0 0.0
  %189 = vmatprep.subr.mxu0 0.0
  %190 = vmatpush1.xpose.msra.mxu0 0.0
  %191 = vmatprep.subr.mxu0 0.0
  %192 = vmatpush1.xpose.msra.mxu0 0.0
  %193 = vmatprep.subr.mxu0 0.0
  %194 = vmatpush1.xpose.msra.mxu0 0.0
  %195 = vmatprep.subr.mxu0 0.0
  %196 = vmatpush1.xpose.msra.mxu0 0.0
  %197 = vmatprep.subr.mxu0 0.0
  %198 = vmatpush1.xpose.msra.mxu0 0.0
  %199 = vmatprep.subr.mxu0 0.0
  %200 = vmatpush1.xpose.msra.mxu0 0.0
  %201 = vmatprep.subr.mxu0 0.0
  %202 = vmatpush1.xpose.msra.mxu0 0.0
  %203 = vmatprep.subr.mxu0 0.0
  %204 = vmatpush1.xpose.msra.mxu0 0.0
  %205 = vmatprep.subr.mxu0 0.0
  %206 = vmatpush1.xpose.msra.mxu0 0.0
  %207 = vmatprep.subr.mxu0 0.0
  %208 = vmatpush1.xpose.msra.mxu0 0.0
  %209 = vmatprep.subr.mxu0 0.0
  %210 = vmatpush1.xpose.msra.mxu0 0.0
  %211 = vmatprep.subr.mxu0 0.0
  %212 = vmatpush1.xpose.msra.mxu0 0.0
  %213 = vmatprep.subr.mxu0 0.0
  %214 = vmatpush1.xpose.msra.mxu0 0.0
  %215 = vmatprep.subr.mxu0 0.0
  %216 = vmatpush1.xpose.msra.mxu0 0.0
  %217 = vmatprep.subr.mxu0 0.0
  %218 = vmatpush1.xpose.msra.mxu0 0.0
  %219 = vmatprep.subr.mxu0 0.0
  %220 = vmatpush1.xpose.msra.mxu0 0.0
  %221 = vmatprep.mubr.f32.mxu0 0.0
  %222 = vmatmul.mubr.f32.gmra.mrb[0].mxu0 %v143
  %v223 = vpop.f32.mrb[0].mxu0
  %v224 = vadd.f32 0.0, %v223
  %v225 = vpop.f32.mrb[0].mxu0
  %226 = vdwg.mxu0
  %v228 = vsel %vm141, %v33, 0
  %230 = vmatprep.subr.mxu0 0.0
  %231 = vmatpush1.xpose.msra.mxu0 %v228
  %232 = vmatprep.subr.mxu0 0.0
  %233 = vmatpush1.xpose.msra.mxu0 0.0
  %234 = vmatprep.subr.mxu0 0.0
  %235 = vmatpush1.xpose.msra.mxu0 0.0
  %236 = vmatprep.subr.mxu0 0.0
  %237 = vmatpush1.xpose.msra.mxu0 0.0
  %238 = vmatprep.subr.mxu0 0.0
  %239 = vmatpush1.xpose.msra.mxu0 0.0
  %240 = vmatprep.subr.mxu0 0.0
  %241 = vmatpush1.xpose.msra.mxu0 0.0
  %242 = vmatprep.subr.mxu0 0.0
  %243 = vmatpush1.xpose.msra.mxu0 0.0
  %244 = vmatprep.subr.mxu0 0.0
  %245 = vmatpush1.xpose.msra.mxu0 0.0
  %246 = vmatprep.subr.mxu0 0.0
  %247 = vmatpush1.xpose.msra.mxu0 0.0
  %248 = vmatprep.subr.mxu0 0.0
  %249 = vmatpush1.xpose.msra.mxu0 0.0
  %250 = vmatprep.subr.mxu0 0.0
  %251 = vmatpush1.xpose.msra.mxu0 0.0
  %252 = vmatprep.subr.mxu0 0.0
  %253 = vmatpush1.xpose.msra.mxu0 0.0
  %254 = vmatprep.subr.mxu0 0.0
  %255 = vmatpush1.xpose.msra.mxu0 0.0
  %256 = vmatprep.subr.mxu0 0.0
  %257 = vmatpush1.xpose.msra.mxu0 0.0
  %258 = vmatprep.subr.mxu0 0.0
  %259 = vmatpush1.xpose.msra.mxu0 0.0
  %260 = vmatprep.subr.mxu0 0.0
  %261 = vmatpush1.xpose.msra.mxu0 0.0
  %262 = vmatprep.subr.mxu0 0.0
  %263 = vmatpush1.xpose.msra.mxu0 0.0
  %264 = vmatprep.subr.mxu0 0.0
  %265 = vmatpush1.xpose.msra.mxu0 0.0
  %266 = vmatprep.subr.mxu0 0.0
  %267 = vmatpush1.xpose.msra.mxu0 0.0
  %268 = vmatprep.subr.mxu0 0.0
  %269 = vmatpush1.xpose.msra.mxu0 0.0
  %270 = vmatprep.subr.mxu0 0.0
  %271 = vmatpush1.xpose.msra.mxu0 0.0
  %272 = vmatprep.subr.mxu0 0.0
  %273 = vmatpush1.xpose.msra.mxu0 0.0
  %274 = vmatprep.subr.mxu0 0.0
  %275 = vmatpush1.xpose.msra.mxu0 0.0
  %276 = vmatprep.subr.mxu0 0.0
  %277 = vmatpush1.xpose.msra.mxu0 0.0
  %278 = vmatprep.subr.mxu0 0.0
  %279 = vmatpush1.xpose.msra.mxu0 0.0
  %280 = vmatprep.subr.mxu0 0.0
  %281 = vmatpush1.xpose.msra.mxu0 0.0
  %282 = vmatprep.subr.mxu0 0.0
  %283 = vmatpush1.xpose.msra.mxu0 0.0
  %284 = vmatprep.subr.mxu0 0.0
  %285 = vmatpush1.xpose.msra.mxu0 0.0
  %286 = vmatprep.subr.mxu0 0.0
  %287 = vmatpush1.xpose.msra.mxu0 0.0
  %288 = vmatprep.subr.mxu0 0.0
  %289 = vmatpush1.xpose.msra.mxu0 0.0
  %290 = vmatprep.subr.mxu0 0.0
  %291 = vmatpush1.xpose.msra.mxu0 0.0
  %292 = vmatprep.subr.mxu0 0.0
  %293 = vmatpush1.xpose.msra.mxu0 0.0
  %294 = vmatprep.mubr.f32.mxu0 0.0
  %295 = vmatmul.mubr.f32.gmra.mrb[0].mxu0 %v146
  %v296 = vpop.f32.mrb[0].mxu0
  %v297 = vadd.f32 0.0, %v296
  %v298 = vpop.f32.mrb[0].mxu0
  %299 = vmatprep.mubr.f32.mxu0 0.0
  %300 = vmatmul.mubr.f32.gmra.mrb[0].mxu0 %v149
  %v301 = vpop.f32.mrb[0].mxu0
  %v302 = vadd.f32 0.0, %v301
  %v303 = vpop.f32.mrb[0].mxu0
  %304 = vmatprep.mubr.f32.mxu0 0.0
  %305 = vmatmul.mubr.f32.gmra.mrb[0].mxu0 %v152
  %v306 = vpop.f32.mrb[0].mxu0
  %v307 = vadd.f32 0.0, %v306
  %v308 = vpop.f32.mrb[0].mxu0
  %309 = vmatprep.mubr.f32.mxu0 0.0
  %310 = vmatmul.mubr.f32.gmra.mrb[0].mxu0 %v155
  %v311 = vpop.f32.mrb[0].mxu0
  %v312 = vadd.f32 0.0, %v311
  %v313 = vpop.f32.mrb[0].mxu0
  %314 = vdwg.mxu0
  %v315 = vsel %vm141, %v123, 1.0
  %v316 = vsel %vm141, %v128, 1.0
  %v317 = vsel %vm141, %v133, 1.0
  %v318 = vsel %vm141, %v138, 1.0
  %320 = vset.pattern.permute.xlu0 0
  %321 = vperm.xlu0 %320, %v297
  %v322 = vpop.permute.xlu0 %321
  %325 = vset.pattern.permute.xlu0 0
  %326 = vperm.xlu0 %325, %v302
  %v327 = vpop.permute.xlu0 %326
  %330 = vset.pattern.permute.xlu0 0
  %331 = vperm.xlu0 %330, %v307
  %v332 = vpop.permute.xlu0 %331
  %335 = vset.pattern.permute.xlu0 0
  %336 = vperm.xlu0 %335, %v312
  %v337 = vpop.permute.xlu0 %336
  %v339 = vlaneseq
  %v340 = vshrl.u32 %v339, 7
  %v341 = vsub.s32 0, %v340
  %v342 = vrot.slane %v224, %v341
  %v343 = vadd.f32 %v322, %v342
  %v344 = vadd.f32 %v327, %v342
  %v345 = vadd.f32 %v332, %v342
  %v346 = vadd.f32 %v337, %v342
  %v347 = vmul.f32 %v343, 0.2
  %v348 = vmul.f32 %v344, 0.2
  %v349 = vmul.f32 %v345, 0.2
  %v350 = vmul.f32 %v346, 0.2
  %v351 = vmax.f32 %v343, %v347
  %v352 = vmax.f32 %v344, %v348
  %v353 = vmax.f32 %v345, %v349
  %v354 = vmax.f32 %v346, %v350
  %v355 = vadd.f32 %v351, %v22
  %v356 = vadd.f32 %v352, %v23
  %v357 = vadd.f32 %v353, %v24
  %v358 = vadd.f32 %v354, %v25
  %vm359 = vcmask 261120
  %v360 = vsel %vm359, %v355, -inf
  %361 = vmax.xlane.f32.xlu0 %v360
  %v362 = vpop.xlane.xlu0 %361
  %v363 = vsel %vm359, %v356, -inf
  %364 = vmax.xlane.f32.xlu0 %v363
  %v365 = vpop.xlane.xlu0 %364
  %v366 = vsel %vm359, %v357, -inf
  %367 = vmax.xlane.f32.xlu0 %v366
  %v368 = vpop.xlane.xlu0 %367
  %v369 = vsel %vm359, %v358, -inf
  %370 = vmax.xlane.f32.xlu0 %v369
  %v371 = vpop.xlane.xlu0 %370
  %v372 = vsub.f32 %v355, %v362
  %v373 = vsub.f32 %v356, %v365
  %v374 = vsub.f32 %v357, %v368
  %v375 = vsub.f32 %v358, %v371
  %v376 = vmul.f32 %v372, 1.442695
  %v377 = vpow.pop %v376
  %v378 = vmul.f32 %v373, 1.442695
  %v379 = vpow.pop %v378
  %v380 = vmul.f32 %v374, 1.442695
  %v381 = vpow.pop %v380
  %v382 = vmul.f32 %v375, 1.442695
  %v383 = vpow.pop %v382
  %v385 = vsel %vm359, %v377, 0
  %v388 = vsel %vm359, %v379, 0
  %v391 = vsel %vm359, %v381, 0
  %v394 = vsel %vm359, %v383, 0
  %396 = vmatprep.subr.mxu0 0.0
  %397 = vmatpush1.msra.mxu0 %v315
  %398 = vmatprep.subr.mxu0 0.0
  %399 = vmatpush1.msra.mxu0 %v316
  %400 = vmatprep.subr.mxu0 0.0
  %401 = vmatpush1.msra.mxu0 %v317
  %402 = vmatprep.subr.mxu0 0.0
  %403 = vmatpush1.msra.mxu0 %v318
  %404 = vmatprep.subr.mxu0 0.0
  %405 = vmatpush1.msra.mxu0 0.0
  %406 = vmatprep.subr.mxu0 0.0
  %407 = vmatpush1.msra.mxu0 0.0
  %408 = vmatprep.subr.mxu0 0.0
  %409 = vmatpush1.msra.mxu0 0.0
  %410 = vmatprep.subr.mxu0 0.0
  %411 = vmatpush1.msra.mxu0 0.0
  %412 = vmatprep.subr.mxu0 0.0
  %413 = vmatpush1.msra.mxu0 0.0
  %414 = vmatprep.subr.mxu0 0.0
  %415 = vmatpush1.msra.mxu0 0.0
  %416 = vmatprep.subr.mxu0 0.0
  %417 = vmatpush1.msra.mxu0 0.0
  %418 = vmatprep.subr.mxu0 0.0
  %419 = vmatpush1.msra.mxu0 0.0
  %420 = vmatprep.subr.mxu0 0.0
  %421 = vmatpush1.msra.mxu0 0.0
  %422 = vmatprep.subr.mxu0 0.0
  %423 = vmatpush1.msra.mxu0 0.0
  %424 = vmatprep.subr.mxu0 0.0
  %425 = vmatpush1.msra.mxu0 0.0
  %426 = vmatprep.subr.mxu0 0.0
  %427 = vmatpush1.msra.mxu0 0.0
  %428 = vmatprep.subr.mxu0 0.0
  %429 = vmatpush1.msra.mxu0 0.0
  %430 = vmatprep.subr.mxu0 0.0
  %431 = vmatpush1.msra.mxu0 0.0
  %432 = vmatprep.subr.mxu0 0.0
  %433 = vmatpush1.msra.mxu0 0.0
  %434 = vmatprep.subr.mxu0 0.0
  %435 = vmatpush1.msra.mxu0 0.0
  %436 = vmatprep.subr.mxu0 0.0
  %437 = vmatpush1.msra.mxu0 0.0
  %438 = vmatprep.subr.mxu0 0.0
  %439 = vmatpush1.msra.mxu0 0.0
  %440 = vmatprep.subr.mxu0 0.0
  %441 = vmatpush1.msra.mxu0 0.0
  %442 = vmatprep.subr.mxu0 0.0
  %443 = vmatpush1.msra.mxu0 0.0
  %444 = vmatprep.subr.mxu0 0.0
  %445 = vmatpush1.msra.mxu0 0.0
  %446 = vmatprep.subr.mxu0 0.0
  %447 = vmatpush1.msra.mxu0 0.0
  %448 = vmatprep.subr.mxu0 0.0
  %449 = vmatpush1.msra.mxu0 0.0
  %450 = vmatprep.subr.mxu0 0.0
  %451 = vmatpush1.msra.mxu0 0.0
  %452 = vmatprep.subr.mxu0 0.0
  %453 = vmatpush1.msra.mxu0 0.0
  %454 = vmatprep.subr.mxu0 0.0
  %455 = vmatpush1.msra.mxu0 0.0
  %456 = vmatprep.subr.mxu0 0.0
  %457 = vmatpush1.msra.mxu0 0.0
  %458 = vmatprep.subr.mxu0 0.0
  %459 = vmatpush1.msra.mxu0 0.0
  %460 = vmatprep.mubr.f32.mxu0 0.0
  %461 = vmatmul.mubr.f32.gmra.mrb[0].mxu0 %v385
  %v462 = vpop.f32.mrb[0].mxu0
  %v463 = vadd.f32 0.0, %v462
  %v464 = vpop.f32.mrb[0].mxu0
  %465 = vmatprep.mubr.f32.mxu0 0.0
  %466 = vmatmul.mubr.f32.gmra.mrb[0].mxu0 %v388
  %v467 = vpop.f32.mrb[0].mxu0
  %v468 = vadd.f32 0.0, %v467
  %v469 = vpop.f32.mrb[0].mxu0
  %470 = vmatprep.mubr.f32.mxu0 0.0
  %471 = vmatmul.mubr.f32.gmra.mrb[0].mxu0 %v391
  %v472 = vpop.f32.mrb[0].mxu0
  %v473 = vadd.f32 0.0, %v472
  %v474 = vpop.f32.mrb[0].mxu0
  %475 = vmatprep.mubr.f32.mxu0 0.0
  %476 = vmatmul.mubr.f32.gmra.mrb[0].mxu0 %v394
  %v477 = vpop.f32.mrb[0].mxu0
  %v478 = vadd.f32 0.0, %v477
  %v479 = vpop.f32.mrb[0].mxu0
  %480 = vdwg.mxu0
  %v481 = vmax.f32 %v463, 1e-30
  %v482 = vmax.f32 %v468, 1e-30
  %v483 = vmax.f32 %v473, 1e-30
  %v484 = vmax.f32 %v478, 1e-30
  %v485 = vrcp.pop %v481
  %v486 = vrcp.pop %v482
  %v487 = vrcp.pop %v483
  %v488 = vrcp.pop %v484
  %v489 = vmul.f32 %v481, %v485
  %v490 = vmul.f32 %v482, %v486
  %v491 = vmul.f32 %v483, %v487
  %v492 = vmul.f32 %v484, %v488
  %v493 = vsub.f32 2.0, %v489
  %v494 = vsub.f32 2.0, %v490
  %v495 = vsub.f32 2.0, %v491
  %v496 = vsub.f32 2.0, %v492
  %v497 = vmul.f32 %v485, %v493
  %v498 = vmul.f32 %v486, %v494
  %v499 = vmul.f32 %v487, %v495
  %v500 = vmul.f32 %v488, %v496
  %502 = vset.pattern.permute.xlu0 64
  %503 = vperm.xlu0 %502, %v497
  %v504 = vpop.permute.xlu0 %503
  %507 = vset.pattern.permute.xlu0 64
  %508 = vperm.xlu0 %507, %v498
  %v509 = vpop.permute.xlu0 %508
  %512 = vset.pattern.permute.xlu0 64
  %513 = vperm.xlu0 %512, %v499
  %v514 = vpop.permute.xlu0 %513
  %517 = vset.pattern.permute.xlu0 64
  %518 = vperm.xlu0 %517, %v500
  %v519 = vpop.permute.xlu0 %518
  %v521 = vmul.f32 %v463, %v504
  %v522 = vmul.f32 %v468, %v509
  %v523 = vmul.f32 %v473, %v514
  %v524 = vmul.f32 %v478, %v519
  %525 = vset.pattern.permute.xlu0 1
  %526 = vperm.xlu0 %525, %v297
  %v527 = vpop.permute.xlu0 %526
  %529 = vset.pattern.permute.xlu0 1
  %530 = vperm.xlu0 %529, %v302
  %v531 = vpop.permute.xlu0 %530
  %533 = vset.pattern.permute.xlu0 1
  %534 = vperm.xlu0 %533, %v307
  %v535 = vpop.permute.xlu0 %534
  %537 = vset.pattern.permute.xlu0 1
  %538 = vperm.xlu0 %537, %v312
  %v539 = vpop.permute.xlu0 %538
  %v541 = vlaneseq
  %v542 = vshrl.u32 %v541, 7
  %v543 = vsub.s32 1, %v542
  %v544 = vrot.slane %v224, %v543
  %v545 = vadd.f32 %v527, %v544
  %v546 = vadd.f32 %v531, %v544
  %v547 = vadd.f32 %v535, %v544
  %v548 = vadd.f32 %v539, %v544
  %v549 = vmul.f32 %v545, 0.2
  %v550 = vmul.f32 %v546, 0.2
  %v551 = vmul.f32 %v547, 0.2
  %v552 = vmul.f32 %v548, 0.2
  %v553 = vmax.f32 %v545, %v549
  %v554 = vmax.f32 %v546, %v550
  %v555 = vmax.f32 %v547, %v551
  %v556 = vmax.f32 %v548, %v552
  %v557 = vadd.f32 %v553, %v22
  %v558 = vadd.f32 %v554, %v23
  %v559 = vadd.f32 %v555, %v24
  %v560 = vadd.f32 %v556, %v25
  %v561 = vsel %vm359, %v557, -inf
  %562 = vmax.xlane.f32.xlu0 %v561
  %v563 = vpop.xlane.xlu0 %562
  %v564 = vsel %vm359, %v558, -inf
  %565 = vmax.xlane.f32.xlu0 %v564
  %v566 = vpop.xlane.xlu0 %565
  %v567 = vsel %vm359, %v559, -inf
  %568 = vmax.xlane.f32.xlu0 %v567
  %v569 = vpop.xlane.xlu0 %568
  %v570 = vsel %vm359, %v560, -inf
  %571 = vmax.xlane.f32.xlu0 %v570
  %v572 = vpop.xlane.xlu0 %571
  %v573 = vsub.f32 %v557, %v563
  %v574 = vsub.f32 %v558, %v566
  %v575 = vsub.f32 %v559, %v569
  %v576 = vsub.f32 %v560, %v572
  %v577 = vmul.f32 %v573, 1.442695
  %v578 = vpow.pop %v577
  %v579 = vmul.f32 %v574, 1.442695
  %v580 = vpow.pop %v579
  %v581 = vmul.f32 %v575, 1.442695
  %v582 = vpow.pop %v581
  %v583 = vmul.f32 %v576, 1.442695
  %v584 = vpow.pop %v583
  %v586 = vsel %vm359, %v578, 0
  %v589 = vsel %vm359, %v580, 0
  %v592 = vsel %vm359, %v582, 0
  %v595 = vsel %vm359, %v584, 0
  %597 = vmatprep.subr.mxu0 0.0
  %598 = vmatpush1.msra.mxu0 %v315
  %599 = vmatprep.subr.mxu0 0.0
  %600 = vmatpush1.msra.mxu0 %v316
  %601 = vmatprep.subr.mxu0 0.0
  %602 = vmatpush1.msra.mxu0 %v317
  %603 = vmatprep.subr.mxu0 0.0
  %604 = vmatpush1.msra.mxu0 %v318
  %605 = vmatprep.subr.mxu0 0.0
  %606 = vmatpush1.msra.mxu0 0.0
  %607 = vmatprep.subr.mxu0 0.0
  %608 = vmatpush1.msra.mxu0 0.0
  %609 = vmatprep.subr.mxu0 0.0
  %610 = vmatpush1.msra.mxu0 0.0
  %611 = vmatprep.subr.mxu0 0.0
  %612 = vmatpush1.msra.mxu0 0.0
  %613 = vmatprep.subr.mxu0 0.0
  %614 = vmatpush1.msra.mxu0 0.0
  %615 = vmatprep.subr.mxu0 0.0
  %616 = vmatpush1.msra.mxu0 0.0
  %617 = vmatprep.subr.mxu0 0.0
  %618 = vmatpush1.msra.mxu0 0.0
  %619 = vmatprep.subr.mxu0 0.0
  %620 = vmatpush1.msra.mxu0 0.0
  %621 = vmatprep.subr.mxu0 0.0
  %622 = vmatpush1.msra.mxu0 0.0
  %623 = vmatprep.subr.mxu0 0.0
  %624 = vmatpush1.msra.mxu0 0.0
  %625 = vmatprep.subr.mxu0 0.0
  %626 = vmatpush1.msra.mxu0 0.0
  %627 = vmatprep.subr.mxu0 0.0
  %628 = vmatpush1.msra.mxu0 0.0
  %629 = vmatprep.subr.mxu0 0.0
  %630 = vmatpush1.msra.mxu0 0.0
  %631 = vmatprep.subr.mxu0 0.0
  %632 = vmatpush1.msra.mxu0 0.0
  %633 = vmatprep.subr.mxu0 0.0
  %634 = vmatpush1.msra.mxu0 0.0
  %635 = vmatprep.subr.mxu0 0.0
  %636 = vmatpush1.msra.mxu0 0.0
  %637 = vmatprep.subr.mxu0 0.0
  %638 = vmatpush1.msra.mxu0 0.0
  %639 = vmatprep.subr.mxu0 0.0
  %640 = vmatpush1.msra.mxu0 0.0
  %641 = vmatprep.subr.mxu0 0.0
  %642 = vmatpush1.msra.mxu0 0.0
  %643 = vmatprep.subr.mxu0 0.0
  %644 = vmatpush1.msra.mxu0 0.0
  %645 = vmatprep.subr.mxu0 0.0
  %646 = vmatpush1.msra.mxu0 0.0
  %647 = vmatprep.subr.mxu0 0.0
  %648 = vmatpush1.msra.mxu0 0.0
  %649 = vmatprep.subr.mxu0 0.0
  %650 = vmatpush1.msra.mxu0 0.0
  %651 = vmatprep.subr.mxu0 0.0
  %652 = vmatpush1.msra.mxu0 0.0
  %653 = vmatprep.subr.mxu0 0.0
  %654 = vmatpush1.msra.mxu0 0.0
  %655 = vmatprep.subr.mxu0 0.0
  %656 = vmatpush1.msra.mxu0 0.0
  %657 = vmatprep.subr.mxu0 0.0
  %658 = vmatpush1.msra.mxu0 0.0
  %659 = vmatprep.subr.mxu0 0.0
  %660 = vmatpush1.msra.mxu0 0.0
  %661 = vmatprep.mubr.f32.mxu0 0.0
  %662 = vmatmul.mubr.f32.gmra.mrb[0].mxu0 %v586
  %v663 = vpop.f32.mrb[0].mxu0
  %v664 = vadd.f32 0.0, %v663
  %v665 = vpop.f32.mrb[0].mxu0
  %666 = vmatprep.mubr.f32.mxu0 0.0
  %667 = vmatmul.mubr.f32.gmra.mrb[0].mxu0 %v589
  %v668 = vpop.f32.mrb[0].mxu0
  %v669 = vadd.f32 0.0, %v668
  %v670 = vpop.f32.mrb[0].mxu0
  %671 = vmatprep.mubr.f32.mxu0 0.0
  %672 = vmatmul.mubr.f32.gmra.mrb[0].mxu0 %v592
  %v673 = vpop.f32.mrb[0].mxu0
  %v674 = vadd.f32 0.0, %v673
  %v675 = vpop.f32.mrb[0].mxu0
  %676 = vmatprep.mubr.f32.mxu0 0.0
  %677 = vmatmul.mubr.f32.gmra.mrb[0].mxu0 %v595
  %v678 = vpop.f32.mrb[0].mxu0
  %v679 = vadd.f32 0.0, %v678
  %v680 = vpop.f32.mrb[0].mxu0
  %681 = vdwg.mxu0
  %v682 = vmax.f32 %v664, 1e-30
  %v683 = vmax.f32 %v669, 1e-30
  %v684 = vmax.f32 %v674, 1e-30
  %v685 = vmax.f32 %v679, 1e-30
  %v686 = vrcp.pop %v682
  %v687 = vrcp.pop %v683
  %v688 = vrcp.pop %v684
  %v689 = vrcp.pop %v685
  %v690 = vmul.f32 %v682, %v686
  %v691 = vmul.f32 %v683, %v687
  %v692 = vmul.f32 %v684, %v688
  %v693 = vmul.f32 %v685, %v689
  %v694 = vsub.f32 2.0, %v690
  %v695 = vsub.f32 2.0, %v691
  %v696 = vsub.f32 2.0, %v692
  %v697 = vsub.f32 2.0, %v693
  %v698 = vmul.f32 %v686, %v694
  %v699 = vmul.f32 %v687, %v695
  %v700 = vmul.f32 %v688, %v696
  %v701 = vmul.f32 %v689, %v697
  %703 = vset.pattern.permute.xlu0 64
  %704 = vperm.xlu0 %703, %v698
  %v705 = vpop.permute.xlu0 %704
  %708 = vset.pattern.permute.xlu0 64
  %709 = vperm.xlu0 %708, %v699
  %v710 = vpop.permute.xlu0 %709
  %713 = vset.pattern.permute.xlu0 64
  %714 = vperm.xlu0 %713, %v700
  %v715 = vpop.permute.xlu0 %714
  %718 = vset.pattern.permute.xlu0 64
  %719 = vperm.xlu0 %718, %v701
  %v720 = vpop.permute.xlu0 %719
  %v722 = vmul.f32 %v664, %v705
  %v723 = vmul.f32 %v669, %v710
  %v724 = vmul.f32 %v674, %v715
  %v725 = vmul.f32 %v679, %v720
  %v726 = vsel %vm359, %v521, %v722
  %v727 = vsel %vm359, %v522, %v723
  %v728 = vsel %vm359, %v523, %v724
  %v729 = vsel %vm359, %v524, %v725
  %v730 = vlaneseq
  %v731 = vshrl.u32 %v730, 7
  %v732 = vsub.s32 0, %v731
  %v733 = vrot.slane %v42, %v732
  %v735 = vsel %vm141, %v726, 0
  %v738 = vsel %vm141, %v727, 0
  %v741 = vsel %vm141, %v728, 0
  %v744 = vsel %vm141, %v729, 0
  %746 = vmatprep.subr.mxu0 0.0
  %747 = vmatpush1.msra.mxu0 %v34
  %748 = vmatprep.subr.mxu0 0.0
  %749 = vmatpush1.msra.mxu0 %v35
  %750 = vmatprep.subr.mxu0 0.0
  %751 = vmatpush1.msra.mxu0 %v36
  %752 = vmatprep.subr.mxu0 0.0
  %753 = vmatpush1.msra.mxu0 %v37
  %754 = vmatprep.subr.mxu0 0.0
  %755 = vmatpush1.msra.mxu0 %v38
  %756 = vmatprep.subr.mxu0 0.0
  %757 = vmatpush1.msra.mxu0 %v39
  %758 = vmatprep.subr.mxu0 0.0
  %759 = vmatpush1.msra.mxu0 %v40
  %760 = vmatprep.subr.mxu0 0.0
  %761 = vmatpush1.msra.mxu0 %v41
  %762 = vmatprep.subr.mxu0 0.0
  %763 = vmatpush1.msra.mxu0 0.0
  %764 = vmatprep.subr.mxu0 0.0
  %765 = vmatpush1.msra.mxu0 0.0
  %766 = vmatprep.subr.mxu0 0.0
  %767 = vmatpush1.msra.mxu0 0.0
  %768 = vmatprep.subr.mxu0 0.0
  %769 = vmatpush1.msra.mxu0 0.0
  %770 = vmatprep.subr.mxu0 0.0
  %771 = vmatpush1.msra.mxu0 0.0
  %772 = vmatprep.subr.mxu0 0.0
  %773 = vmatpush1.msra.mxu0 0.0
  %774 = vmatprep.subr.mxu0 0.0
  %775 = vmatpush1.msra.mxu0 0.0
  %776 = vmatprep.subr.mxu0 0.0
  %777 = vmatpush1.msra.mxu0 0.0
  %778 = vmatprep.subr.mxu0 0.0
  %779 = vmatpush1.msra.mxu0 0.0
  %780 = vmatprep.subr.mxu0 0.0
  %781 = vmatpush1.msra.mxu0 0.0
  %782 = vmatprep.subr.mxu0 0.0
  %783 = vmatpush1.msra.mxu0 0.0
  %784 = vmatprep.subr.mxu0 0.0
  %785 = vmatpush1.msra.mxu0 0.0
  %786 = vmatprep.subr.mxu0 0.0
  %787 = vmatpush1.msra.mxu0 0.0
  %788 = vmatprep.subr.mxu0 0.0
  %789 = vmatpush1.msra.mxu0 0.0
  %790 = vmatprep.subr.mxu0 0.0
  %791 = vmatpush1.msra.mxu0 0.0
  %792 = vmatprep.subr.mxu0 0.0
  %793 = vmatpush1.msra.mxu0 0.0
  %794 = vmatprep.subr.mxu0 0.0
  %795 = vmatpush1.msra.mxu0 0.0
  %796 = vmatprep.subr.mxu0 0.0
  %797 = vmatpush1.msra.mxu0 0.0
  %798 = vmatprep.subr.mxu0 0.0
  %799 = vmatpush1.msra.mxu0 0.0
  %800 = vmatprep.subr.mxu0 0.0
  %801 = vmatpush1.msra.mxu0 0.0
  %802 = vmatprep.subr.mxu0 0.0
  %803 = vmatpush1.msra.mxu0 0.0
  %804 = vmatprep.subr.mxu0 0.0
  %805 = vmatpush1.msra.mxu0 0.0
  %806 = vmatprep.subr.mxu0 0.0
  %807 = vmatpush1.msra.mxu0 0.0
  %808 = vmatprep.subr.mxu0 0.0
  %809 = vmatpush1.msra.mxu0 0.0
  %810 = vmatprep.mubr.f32.mxu0 0.0
  %811 = vmatmul.mubr.f32.gmra.mrb[0].mxu0 %v735
  %v812 = vpop.f32.mrb[0].mxu0
  %v813 = vadd.f32 %v733, %v812
  %v814 = vpop.f32.mrb[0].mxu0
  %815 = vmatprep.mubr.f32.mxu0 0.0
  %816 = vmatmul.mubr.f32.gmra.mrb[0].mxu0 %v738
  %v817 = vpop.f32.mrb[0].mxu0
  %v818 = vadd.f32 %v733, %v817
  %v819 = vpop.f32.mrb[0].mxu0
  %820 = vmatprep.mubr.f32.mxu0 0.0
  %821 = vmatmul.mubr.f32.gmra.mrb[0].mxu0 %v741
  %v822 = vpop.f32.mrb[0].mxu0
  %v823 = vadd.f32 %v733, %v822
  %v824 = vpop.f32.mrb[0].mxu0
  %825 = vmatprep.mubr.f32.mxu0 0.0
  %826 = vmatmul.mubr.f32.gmra.mrb[0].mxu0 %v744
  %v827 = vpop.f32.mrb[0].mxu0
  %v828 = vadd.f32 %v733, %v827
  %v829 = vpop.f32.mrb[0].mxu0
  %830 = vdwg.mxu0
  %v831 = vmax.f32 %v813, 0.0
  %v832 = vmax.f32 %v818, 0.0
  %v833 = vmax.f32 %v823, 0.0
  %v834 = vmax.f32 %v828, 0.0
  %v835 = vld [vmem:[%s2 + $0x68] sm:$0xff]
  %v836 = vld [vmem:[%s2 + $0x70] sm:$0xff]
  %v837 = vld [vmem:[%s2 + $0x78] sm:$0xff]
  %v838 = vld [vmem:[%s2 + $0x80] sm:$0xff]
  %v839 = vld [vmem:[%s2 + $0x88] sm:$0x3]
  %v840 = vld [vmem:[%s2 + $0x90] sm:$0x3]
  %v841 = vld [vmem:[%s2 + $0x98] sm:$0xff]
  %v842 = vld [vmem:[%s2 + $0xa0] sm:$0xff]
  %v843 = vld [vmem:[%s2 + $0xa8] sm:$0x1]
  %v845 = vsel %vm359, %v831, 0
  %v848 = vsel %vm359, %v832, 0
  %v851 = vsel %vm359, %v833, 0
  %v854 = vsel %vm359, %v834, 0
  %856 = vmatprep.subr.mxu0 0.0
  %857 = vmatpush1.msra.mxu0 %v835
  %858 = vmatprep.subr.mxu0 0.0
  %859 = vmatpush1.msra.mxu0 %v836
  %860 = vmatprep.subr.mxu0 0.0
  %861 = vmatpush1.msra.mxu0 %v837
  %862 = vmatprep.subr.mxu0 0.0
  %863 = vmatpush1.msra.mxu0 %v838
  %864 = vmatprep.subr.mxu0 0.0
  %865 = vmatpush1.msra.mxu0 0.0
  %866 = vmatprep.subr.mxu0 0.0
  %867 = vmatpush1.msra.mxu0 0.0
  %868 = vmatprep.subr.mxu0 0.0
  %869 = vmatpush1.msra.mxu0 0.0
  %870 = vmatprep.subr.mxu0 0.0
  %871 = vmatpush1.msra.mxu0 0.0
  %872 = vmatprep.subr.mxu0 0.0
  %873 = vmatpush1.msra.mxu0 0.0
  %874 = vmatprep.subr.mxu0 0.0
  %875 = vmatpush1.msra.mxu0 0.0
  %876 = vmatprep.subr.mxu0 0.0
  %877 = vmatpush1.msra.mxu0 0.0
  %878 = vmatprep.subr.mxu0 0.0
  %879 = vmatpush1.msra.mxu0 0.0
  %880 = vmatprep.subr.mxu0 0.0
  %881 = vmatpush1.msra.mxu0 0.0
  %882 = vmatprep.subr.mxu0 0.0
  %883 = vmatpush1.msra.mxu0 0.0
  %884 = vmatprep.subr.mxu0 0.0
  %885 = vmatpush1.msra.mxu0 0.0
  %886 = vmatprep.subr.mxu0 0.0
  %887 = vmatpush1.msra.mxu0 0.0
  %888 = vmatprep.subr.mxu0 0.0
  %889 = vmatpush1.msra.mxu0 0.0
  %890 = vmatprep.subr.mxu0 0.0
  %891 = vmatpush1.msra.mxu0 0.0
  %892 = vmatprep.subr.mxu0 0.0
  %893 = vmatpush1.msra.mxu0 0.0
  %894 = vmatprep.subr.mxu0 0.0
  %895 = vmatpush1.msra.mxu0 0.0
  %896 = vmatprep.subr.mxu0 0.0
  %897 = vmatpush1.msra.mxu0 0.0
  %898 = vmatprep.subr.mxu0 0.0
  %899 = vmatpush1.msra.mxu0 0.0
  %900 = vmatprep.subr.mxu0 0.0
  %901 = vmatpush1.msra.mxu0 0.0
  %902 = vmatprep.subr.mxu0 0.0
  %903 = vmatpush1.msra.mxu0 0.0
  %904 = vmatprep.subr.mxu0 0.0
  %905 = vmatpush1.msra.mxu0 0.0
  %906 = vmatprep.subr.mxu0 0.0
  %907 = vmatpush1.msra.mxu0 0.0
  %908 = vmatprep.subr.mxu0 0.0
  %909 = vmatpush1.msra.mxu0 0.0
  %910 = vmatprep.subr.mxu0 0.0
  %911 = vmatpush1.msra.mxu0 0.0
  %912 = vmatprep.subr.mxu0 0.0
  %913 = vmatpush1.msra.mxu0 0.0
  %914 = vmatprep.subr.mxu0 0.0
  %915 = vmatpush1.msra.mxu0 0.0
  %916 = vmatprep.subr.mxu0 0.0
  %917 = vmatpush1.msra.mxu0 0.0
  %918 = vmatprep.subr.mxu0 0.0
  %919 = vmatpush1.msra.mxu0 0.0
  %920 = vmatprep.mubr.f32.mxu0 0.0
  %921 = vmatmul.mubr.f32.gmra.mrb[0].mxu0 %v845
  %v922 = vpop.f32.mrb[0].mxu0
  %v923 = vadd.f32 0.0, %v922
  %v924 = vpop.f32.mrb[0].mxu0
  %925 = vmatprep.mubr.f32.mxu0 0.0
  %926 = vmatmul.mubr.f32.gmra.mrb[0].mxu0 %v848
  %v927 = vpop.f32.mrb[0].mxu0
  %v928 = vadd.f32 0.0, %v927
  %v929 = vpop.f32.mrb[0].mxu0
  %930 = vmatprep.mubr.f32.mxu0 0.0
  %931 = vmatmul.mubr.f32.gmra.mrb[0].mxu0 %v851
  %v932 = vpop.f32.mrb[0].mxu0
  %v933 = vadd.f32 0.0, %v932
  %v934 = vpop.f32.mrb[0].mxu0
  %935 = vmatprep.mubr.f32.mxu0 0.0
  %936 = vmatmul.mubr.f32.gmra.mrb[0].mxu0 %v854
  %v937 = vpop.f32.mrb[0].mxu0
  %v938 = vadd.f32 0.0, %v937
  %v939 = vpop.f32.mrb[0].mxu0
  %940 = vdwg.mxu0
  %v942 = vsel %vm43, %v839, 0
  %v945 = vsel %vm43, %v923, 0
  %v948 = vsel %vm43, %v928, 0
  %v951 = vsel %vm43, %v933, 0
  %v954 = vsel %vm43, %v938, 0
  %956 = vmatprep.subr.mxu0 0.0
  %957 = vmatpush1.xpose.msra.mxu0 %v945
  %958 = vmatprep.subr.mxu0 0.0
  %959 = vmatpush1.xpose.msra.mxu0 %v948
  %960 = vmatprep.subr.mxu0 0.0
  %961 = vmatpush1.xpose.msra.mxu0 %v951
  %962 = vmatprep.subr.mxu0 0.0
  %963 = vmatpush1.xpose.msra.mxu0 %v954
  %964 = vmatprep.subr.mxu0 0.0
  %965 = vmatpush1.xpose.msra.mxu0 0.0
  %966 = vmatprep.subr.mxu0 0.0
  %967 = vmatpush1.xpose.msra.mxu0 0.0
  %968 = vmatprep.subr.mxu0 0.0
  %969 = vmatpush1.xpose.msra.mxu0 0.0
  %970 = vmatprep.subr.mxu0 0.0
  %971 = vmatpush1.xpose.msra.mxu0 0.0
  %972 = vmatprep.subr.mxu0 0.0
  %973 = vmatpush1.xpose.msra.mxu0 0.0
  %974 = vmatprep.subr.mxu0 0.0
  %975 = vmatpush1.xpose.msra.mxu0 0.0
  %976 = vmatprep.subr.mxu0 0.0
  %977 = vmatpush1.xpose.msra.mxu0 0.0
  %978 = vmatprep.subr.mxu0 0.0
  %979 = vmatpush1.xpose.msra.mxu0 0.0
  %980 = vmatprep.subr.mxu0 0.0
  %981 = vmatpush1.xpose.msra.mxu0 0.0
  %982 = vmatprep.subr.mxu0 0.0
  %983 = vmatpush1.xpose.msra.mxu0 0.0
  %984 = vmatprep.subr.mxu0 0.0
  %985 = vmatpush1.xpose.msra.mxu0 0.0
  %986 = vmatprep.subr.mxu0 0.0
  %987 = vmatpush1.xpose.msra.mxu0 0.0
  %988 = vmatprep.subr.mxu0 0.0
  %989 = vmatpush1.xpose.msra.mxu0 0.0
  %990 = vmatprep.subr.mxu0 0.0
  %991 = vmatpush1.xpose.msra.mxu0 0.0
  %992 = vmatprep.subr.mxu0 0.0
  %993 = vmatpush1.xpose.msra.mxu0 0.0
  %994 = vmatprep.subr.mxu0 0.0
  %995 = vmatpush1.xpose.msra.mxu0 0.0
  %996 = vmatprep.subr.mxu0 0.0
  %997 = vmatpush1.xpose.msra.mxu0 0.0
  %998 = vmatprep.subr.mxu0 0.0
  %999 = vmatpush1.xpose.msra.mxu0 0.0
  %1000 = vmatprep.subr.mxu0 0.0
  %1001 = vmatpush1.xpose.msra.mxu0 0.0
  %1002 = vmatprep.subr.mxu0 0.0
  %1003 = vmatpush1.xpose.msra.mxu0 0.0
  %1004 = vmatprep.subr.mxu0 0.0
  %1005 = vmatpush1.xpose.msra.mxu0 0.0
  %1006 = vmatprep.subr.mxu0 0.0
  %1007 = vmatpush1.xpose.msra.mxu0 0.0
  %1008 = vmatprep.subr.mxu0 0.0
  %1009 = vmatpush1.xpose.msra.mxu0 0.0
  %1010 = vmatprep.subr.mxu0 0.0
  %1011 = vmatpush1.xpose.msra.mxu0 0.0
  %1012 = vmatprep.subr.mxu0 0.0
  %1013 = vmatpush1.xpose.msra.mxu0 0.0
  %1014 = vmatprep.subr.mxu0 0.0
  %1015 = vmatpush1.xpose.msra.mxu0 0.0
  %1016 = vmatprep.subr.mxu0 0.0
  %1017 = vmatpush1.xpose.msra.mxu0 0.0
  %1018 = vmatprep.subr.mxu0 0.0
  %1019 = vmatpush1.xpose.msra.mxu0 0.0
  %1020 = vmatprep.mubr.f32.mxu0 0.0
  %1021 = vmatmul.mubr.f32.gmra.mrb[0].mxu0 %v942
  %v1022 = vpop.f32.mrb[0].mxu0
  %v1023 = vadd.f32 0.0, %v1022
  %v1024 = vpop.f32.mrb[0].mxu0
  %1025 = vdwg.mxu0
  %v1027 = vsel %vm43, %v840, 0
  %1029 = vmatprep.subr.mxu0 0.0
  %1030 = vmatpush1.xpose.msra.mxu0 %v1027
  %1031 = vmatprep.subr.mxu0 0.0
  %1032 = vmatpush1.xpose.msra.mxu0 0.0
  %1033 = vmatprep.subr.mxu0 0.0
  %1034 = vmatpush1.xpose.msra.mxu0 0.0
  %1035 = vmatprep.subr.mxu0 0.0
  %1036 = vmatpush1.xpose.msra.mxu0 0.0
  %1037 = vmatprep.subr.mxu0 0.0
  %1038 = vmatpush1.xpose.msra.mxu0 0.0
  %1039 = vmatprep.subr.mxu0 0.0
  %1040 = vmatpush1.xpose.msra.mxu0 0.0
  %1041 = vmatprep.subr.mxu0 0.0
  %1042 = vmatpush1.xpose.msra.mxu0 0.0
  %1043 = vmatprep.subr.mxu0 0.0
  %1044 = vmatpush1.xpose.msra.mxu0 0.0
  %1045 = vmatprep.subr.mxu0 0.0
  %1046 = vmatpush1.xpose.msra.mxu0 0.0
  %1047 = vmatprep.subr.mxu0 0.0
  %1048 = vmatpush1.xpose.msra.mxu0 0.0
  %1049 = vmatprep.subr.mxu0 0.0
  %1050 = vmatpush1.xpose.msra.mxu0 0.0
  %1051 = vmatprep.subr.mxu0 0.0
  %1052 = vmatpush1.xpose.msra.mxu0 0.0
  %1053 = vmatprep.subr.mxu0 0.0
  %1054 = vmatpush1.xpose.msra.mxu0 0.0
  %1055 = vmatprep.subr.mxu0 0.0
  %1056 = vmatpush1.xpose.msra.mxu0 0.0
  %1057 = vmatprep.subr.mxu0 0.0
  %1058 = vmatpush1.xpose.msra.mxu0 0.0
  %1059 = vmatprep.subr.mxu0 0.0
  %1060 = vmatpush1.xpose.msra.mxu0 0.0
  %1061 = vmatprep.subr.mxu0 0.0
  %1062 = vmatpush1.xpose.msra.mxu0 0.0
  %1063 = vmatprep.subr.mxu0 0.0
  %1064 = vmatpush1.xpose.msra.mxu0 0.0
  %1065 = vmatprep.subr.mxu0 0.0
  %1066 = vmatpush1.xpose.msra.mxu0 0.0
  %1067 = vmatprep.subr.mxu0 0.0
  %1068 = vmatpush1.xpose.msra.mxu0 0.0
  %1069 = vmatprep.subr.mxu0 0.0
  %1070 = vmatpush1.xpose.msra.mxu0 0.0
  %1071 = vmatprep.subr.mxu0 0.0
  %1072 = vmatpush1.xpose.msra.mxu0 0.0
  %1073 = vmatprep.subr.mxu0 0.0
  %1074 = vmatpush1.xpose.msra.mxu0 0.0
  %1075 = vmatprep.subr.mxu0 0.0
  %1076 = vmatpush1.xpose.msra.mxu0 0.0
  %1077 = vmatprep.subr.mxu0 0.0
  %1078 = vmatpush1.xpose.msra.mxu0 0.0
  %1079 = vmatprep.subr.mxu0 0.0
  %1080 = vmatpush1.xpose.msra.mxu0 0.0
  %1081 = vmatprep.subr.mxu0 0.0
  %1082 = vmatpush1.xpose.msra.mxu0 0.0
  %1083 = vmatprep.subr.mxu0 0.0
  %1084 = vmatpush1.xpose.msra.mxu0 0.0
  %1085 = vmatprep.subr.mxu0 0.0
  %1086 = vmatpush1.xpose.msra.mxu0 0.0
  %1087 = vmatprep.subr.mxu0 0.0
  %1088 = vmatpush1.xpose.msra.mxu0 0.0
  %1089 = vmatprep.subr.mxu0 0.0
  %1090 = vmatpush1.xpose.msra.mxu0 0.0
  %1091 = vmatprep.subr.mxu0 0.0
  %1092 = vmatpush1.xpose.msra.mxu0 0.0
  %1093 = vmatprep.mubr.f32.mxu0 0.0
  %1094 = vmatmul.mubr.f32.gmra.mrb[0].mxu0 %v945
  %v1095 = vpop.f32.mrb[0].mxu0
  %v1096 = vadd.f32 0.0, %v1095
  %v1097 = vpop.f32.mrb[0].mxu0
  %1098 = vmatprep.mubr.f32.mxu0 0.0
  %1099 = vmatmul.mubr.f32.gmra.mrb[0].mxu0 %v948
  %v1100 = vpop.f32.mrb[0].mxu0
  %v1101 = vadd.f32 0.0, %v1100
  %v1102 = vpop.f32.mrb[0].mxu0
  %1103 = vmatprep.mubr.f32.mxu0 0.0
  %1104 = vmatmul.mubr.f32.gmra.mrb[0].mxu0 %v951
  %v1105 = vpop.f32.mrb[0].mxu0
  %v1106 = vadd.f32 0.0, %v1105
  %v1107 = vpop.f32.mrb[0].mxu0
  %1108 = vmatprep.mubr.f32.mxu0 0.0
  %1109 = vmatmul.mubr.f32.gmra.mrb[0].mxu0 %v954
  %v1110 = vpop.f32.mrb[0].mxu0
  %v1111 = vadd.f32 0.0, %v1110
  %v1112 = vpop.f32.mrb[0].mxu0
  %1113 = vdwg.mxu0
  %v1114 = vsel %vm43, %v923, 1.0
  %v1115 = vsel %vm43, %v928, 1.0
  %v1116 = vsel %vm43, %v933, 1.0
  %v1117 = vsel %vm43, %v938, 1.0
  %1119 = vset.pattern.permute.xlu0 0
  %1120 = vperm.xlu0 %1119, %v1096
  %v1121 = vpop.permute.xlu0 %1120
  %1124 = vset.pattern.permute.xlu0 0
  %1125 = vperm.xlu0 %1124, %v1101
  %v1126 = vpop.permute.xlu0 %1125
  %1129 = vset.pattern.permute.xlu0 0
  %1130 = vperm.xlu0 %1129, %v1106
  %v1131 = vpop.permute.xlu0 %1130
  %1134 = vset.pattern.permute.xlu0 0
  %1135 = vperm.xlu0 %1134, %v1111
  %v1136 = vpop.permute.xlu0 %1135
  %v1138 = vlaneseq
  %v1139 = vshrl.u32 %v1138, 7
  %v1140 = vsub.s32 0, %v1139
  %v1141 = vrot.slane %v1023, %v1140
  %v1142 = vadd.f32 %v1121, %v1141
  %v1143 = vadd.f32 %v1126, %v1141
  %v1144 = vadd.f32 %v1131, %v1141
  %v1145 = vadd.f32 %v1136, %v1141
  %v1146 = vmul.f32 %v1142, 0.2
  %v1147 = vmul.f32 %v1143, 0.2
  %v1148 = vmul.f32 %v1144, 0.2
  %v1149 = vmul.f32 %v1145, 0.2
  %v1150 = vmax.f32 %v1142, %v1146
  %v1151 = vmax.f32 %v1143, %v1147
  %v1152 = vmax.f32 %v1144, %v1148
  %v1153 = vmax.f32 %v1145, %v1149
  %v1154 = vadd.f32 %v1150, %v22
  %v1155 = vadd.f32 %v1151, %v23
  %v1156 = vadd.f32 %v1152, %v24
  %v1157 = vadd.f32 %v1153, %v25
  %v1158 = vsel %vm359, %v1154, -inf
  %1159 = vmax.xlane.f32.xlu0 %v1158
  %v1160 = vpop.xlane.xlu0 %1159
  %v1161 = vsel %vm359, %v1155, -inf
  %1162 = vmax.xlane.f32.xlu0 %v1161
  %v1163 = vpop.xlane.xlu0 %1162
  %v1164 = vsel %vm359, %v1156, -inf
  %1165 = vmax.xlane.f32.xlu0 %v1164
  %v1166 = vpop.xlane.xlu0 %1165
  %v1167 = vsel %vm359, %v1157, -inf
  %1168 = vmax.xlane.f32.xlu0 %v1167
  %v1169 = vpop.xlane.xlu0 %1168
  %v1170 = vsub.f32 %v1154, %v1160
  %v1171 = vsub.f32 %v1155, %v1163
  %v1172 = vsub.f32 %v1156, %v1166
  %v1173 = vsub.f32 %v1157, %v1169
  %v1174 = vmul.f32 %v1170, 1.442695
  %v1175 = vpow.pop %v1174
  %v1176 = vmul.f32 %v1171, 1.442695
  %v1177 = vpow.pop %v1176
  %v1178 = vmul.f32 %v1172, 1.442695
  %v1179 = vpow.pop %v1178
  %v1180 = vmul.f32 %v1173, 1.442695
  %v1181 = vpow.pop %v1180
  %v1183 = vsel %vm359, %v1175, 0
  %v1186 = vsel %vm359, %v1177, 0
  %v1189 = vsel %vm359, %v1179, 0
  %v1192 = vsel %vm359, %v1181, 0
  %1194 = vmatprep.subr.mxu0 0.0
  %1195 = vmatpush1.msra.mxu0 %v1114
  %1196 = vmatprep.subr.mxu0 0.0
  %1197 = vmatpush1.msra.mxu0 %v1115
  %1198 = vmatprep.subr.mxu0 0.0
  %1199 = vmatpush1.msra.mxu0 %v1116
  %1200 = vmatprep.subr.mxu0 0.0
  %1201 = vmatpush1.msra.mxu0 %v1117
  %1202 = vmatprep.subr.mxu0 0.0
  %1203 = vmatpush1.msra.mxu0 0.0
  %1204 = vmatprep.subr.mxu0 0.0
  %1205 = vmatpush1.msra.mxu0 0.0
  %1206 = vmatprep.subr.mxu0 0.0
  %1207 = vmatpush1.msra.mxu0 0.0
  %1208 = vmatprep.subr.mxu0 0.0
  %1209 = vmatpush1.msra.mxu0 0.0
  %1210 = vmatprep.subr.mxu0 0.0
  %1211 = vmatpush1.msra.mxu0 0.0
  %1212 = vmatprep.subr.mxu0 0.0
  %1213 = vmatpush1.msra.mxu0 0.0
  %1214 = vmatprep.subr.mxu0 0.0
  %1215 = vmatpush1.msra.mxu0 0.0
  %1216 = vmatprep.subr.mxu0 0.0
  %1217 = vmatpush1.msra.mxu0 0.0
  %1218 = vmatprep.subr.mxu0 0.0
  %1219 = vmatpush1.msra.mxu0 0.0
  %1220 = vmatprep.subr.mxu0 0.0
  %1221 = vmatpush1.msra.mxu0 0.0
  %1222 = vmatprep.subr.mxu0 0.0
  %1223 = vmatpush1.msra.mxu0 0.0
  %1224 = vmatprep.subr.mxu0 0.0
  %1225 = vmatpush1.msra.mxu0 0.0
  %1226 = vmatprep.subr.mxu0 0.0
  %1227 = vmatpush1.msra.mxu0 0.0
  %1228 = vmatprep.subr.mxu0 0.0
  %1229 = vmatpush1.msra.mxu0 0.0
  %1230 = vmatprep.subr.mxu0 0.0
  %1231 = vmatpush1.msra.mxu0 0.0
  %1232 = vmatprep.subr.mxu0 0.0
  %1233 = vmatpush1.msra.mxu0 0.0
  %1234 = vmatprep.subr.mxu0 0.0
  %1235 = vmatpush1.msra.mxu0 0.0
  %1236 = vmatprep.subr.mxu0 0.0
  %1237 = vmatpush1.msra.mxu0 0.0
  %1238 = vmatprep.subr.mxu0 0.0
  %1239 = vmatpush1.msra.mxu0 0.0
  %1240 = vmatprep.subr.mxu0 0.0
  %1241 = vmatpush1.msra.mxu0 0.0
  %1242 = vmatprep.subr.mxu0 0.0
  %1243 = vmatpush1.msra.mxu0 0.0
  %1244 = vmatprep.subr.mxu0 0.0
  %1245 = vmatpush1.msra.mxu0 0.0
  %1246 = vmatprep.subr.mxu0 0.0
  %1247 = vmatpush1.msra.mxu0 0.0
  %1248 = vmatprep.subr.mxu0 0.0
  %1249 = vmatpush1.msra.mxu0 0.0
  %1250 = vmatprep.subr.mxu0 0.0
  %1251 = vmatpush1.msra.mxu0 0.0
  %1252 = vmatprep.subr.mxu0 0.0
  %1253 = vmatpush1.msra.mxu0 0.0
  %1254 = vmatprep.subr.mxu0 0.0
  %1255 = vmatpush1.msra.mxu0 0.0
  %1256 = vmatprep.subr.mxu0 0.0
  %1257 = vmatpush1.msra.mxu0 0.0
  %1258 = vmatprep.mubr.f32.mxu0 0.0
  %1259 = vmatmul.mubr.f32.gmra.mrb[0].mxu0 %v1183
  %v1260 = vpop.f32.mrb[0].mxu0
  %v1261 = vadd.f32 0.0, %v1260
  %v1262 = vpop.f32.mrb[0].mxu0
  %1263 = vmatprep.mubr.f32.mxu0 0.0
  %1264 = vmatmul.mubr.f32.gmra.mrb[0].mxu0 %v1186
  %v1265 = vpop.f32.mrb[0].mxu0
  %v1266 = vadd.f32 0.0, %v1265
  %v1267 = vpop.f32.mrb[0].mxu0
  %1268 = vmatprep.mubr.f32.mxu0 0.0
  %1269 = vmatmul.mubr.f32.gmra.mrb[0].mxu0 %v1189
  %v1270 = vpop.f32.mrb[0].mxu0
  %v1271 = vadd.f32 0.0, %v1270
  %v1272 = vpop.f32.mrb[0].mxu0
  %1273 = vmatprep.mubr.f32.mxu0 0.0
  %1274 = vmatmul.mubr.f32.gmra.mrb[0].mxu0 %v1192
  %v1275 = vpop.f32.mrb[0].mxu0
  %v1276 = vadd.f32 0.0, %v1275
  %v1277 = vpop.f32.mrb[0].mxu0
  %1278 = vdwg.mxu0
  %v1279 = vmax.f32 %v1261, 1e-30
  %v1280 = vmax.f32 %v1266, 1e-30
  %v1281 = vmax.f32 %v1271, 1e-30
  %v1282 = vmax.f32 %v1276, 1e-30
  %v1283 = vrcp.pop %v1279
  %v1284 = vrcp.pop %v1280
  %v1285 = vrcp.pop %v1281
  %v1286 = vrcp.pop %v1282
  %v1287 = vmul.f32 %v1279, %v1283
  %v1288 = vmul.f32 %v1280, %v1284
  %v1289 = vmul.f32 %v1281, %v1285
  %v1290 = vmul.f32 %v1282, %v1286
  %v1291 = vsub.f32 2.0, %v1287
  %v1292 = vsub.f32 2.0, %v1288
  %v1293 = vsub.f32 2.0, %v1289
  %v1294 = vsub.f32 2.0, %v1290
  %v1295 = vmul.f32 %v1283, %v1291
  %v1296 = vmul.f32 %v1284, %v1292
  %v1297 = vmul.f32 %v1285, %v1293
  %v1298 = vmul.f32 %v1286, %v1294
  %1300 = vset.pattern.permute.xlu0 16
  %1301 = vperm.xlu0 %1300, %v1295
  %v1302 = vpop.permute.xlu0 %1301
  %1305 = vset.pattern.permute.xlu0 16
  %1306 = vperm.xlu0 %1305, %v1296
  %v1307 = vpop.permute.xlu0 %1306
  %1310 = vset.pattern.permute.xlu0 16
  %1311 = vperm.xlu0 %1310, %v1297
  %v1312 = vpop.permute.xlu0 %1311
  %1315 = vset.pattern.permute.xlu0 16
  %1316 = vperm.xlu0 %1315, %v1298
  %v1317 = vpop.permute.xlu0 %1316
  %v1319 = vmul.f32 %v1261, %v1302
  %v1320 = vmul.f32 %v1266, %v1307
  %v1321 = vmul.f32 %v1271, %v1312
  %v1322 = vmul.f32 %v1276, %v1317
  %1323 = vset.pattern.permute.xlu0 1
  %1324 = vperm.xlu0 %1323, %v1096
  %v1325 = vpop.permute.xlu0 %1324
  %1327 = vset.pattern.permute.xlu0 1
  %1328 = vperm.xlu0 %1327, %v1101
  %v1329 = vpop.permute.xlu0 %1328
  %1331 = vset.pattern.permute.xlu0 1
  %1332 = vperm.xlu0 %1331, %v1106
  %v1333 = vpop.permute.xlu0 %1332
  %1335 = vset.pattern.permute.xlu0 1
  %1336 = vperm.xlu0 %1335, %v1111
  %v1337 = vpop.permute.xlu0 %1336
  %v1339 = vlaneseq
  %v1340 = vshrl.u32 %v1339, 7
  %v1341 = vsub.s32 1, %v1340
  %v1342 = vrot.slane %v1023, %v1341
  %v1343 = vadd.f32 %v1325, %v1342
  %v1344 = vadd.f32 %v1329, %v1342
  %v1345 = vadd.f32 %v1333, %v1342
  %v1346 = vadd.f32 %v1337, %v1342
  %v1347 = vmul.f32 %v1343, 0.2
  %v1348 = vmul.f32 %v1344, 0.2
  %v1349 = vmul.f32 %v1345, 0.2
  %v1350 = vmul.f32 %v1346, 0.2
  %v1351 = vmax.f32 %v1343, %v1347
  %v1352 = vmax.f32 %v1344, %v1348
  %v1353 = vmax.f32 %v1345, %v1349
  %v1354 = vmax.f32 %v1346, %v1350
  %v1355 = vadd.f32 %v1351, %v22
  %v1356 = vadd.f32 %v1352, %v23
  %v1357 = vadd.f32 %v1353, %v24
  %v1358 = vadd.f32 %v1354, %v25
  %v1359 = vsel %vm359, %v1355, -inf
  %1360 = vmax.xlane.f32.xlu0 %v1359
  %v1361 = vpop.xlane.xlu0 %1360
  %v1362 = vsel %vm359, %v1356, -inf
  %1363 = vmax.xlane.f32.xlu0 %v1362
  %v1364 = vpop.xlane.xlu0 %1363
  %v1365 = vsel %vm359, %v1357, -inf
  %1366 = vmax.xlane.f32.xlu0 %v1365
  %v1367 = vpop.xlane.xlu0 %1366
  %v1368 = vsel %vm359, %v1358, -inf
  %1369 = vmax.xlane.f32.xlu0 %v1368
  %v1370 = vpop.xlane.xlu0 %1369
  %v1371 = vsub.f32 %v1355, %v1361
  %v1372 = vsub.f32 %v1356, %v1364
  %v1373 = vsub.f32 %v1357, %v1367
  %v1374 = vsub.f32 %v1358, %v1370
  %v1375 = vmul.f32 %v1371, 1.442695
  %v1376 = vpow.pop %v1375
  %v1377 = vmul.f32 %v1372, 1.442695
  %v1378 = vpow.pop %v1377
  %v1379 = vmul.f32 %v1373, 1.442695
  %v1380 = vpow.pop %v1379
  %v1381 = vmul.f32 %v1374, 1.442695
  %v1382 = vpow.pop %v1381
  %v1384 = vsel %vm359, %v1376, 0
  %v1387 = vsel %vm359, %v1378, 0
  %v1390 = vsel %vm359, %v1380, 0
  %v1393 = vsel %vm359, %v1382, 0
  %1395 = vmatprep.subr.mxu0 0.0
  %1396 = vmatpush1.msra.mxu0 %v1114
  %1397 = vmatprep.subr.mxu0 0.0
  %1398 = vmatpush1.msra.mxu0 %v1115
  %1399 = vmatprep.subr.mxu0 0.0
  %1400 = vmatpush1.msra.mxu0 %v1116
  %1401 = vmatprep.subr.mxu0 0.0
  %1402 = vmatpush1.msra.mxu0 %v1117
  %1403 = vmatprep.subr.mxu0 0.0
  %1404 = vmatpush1.msra.mxu0 0.0
  %1405 = vmatprep.subr.mxu0 0.0
  %1406 = vmatpush1.msra.mxu0 0.0
  %1407 = vmatprep.subr.mxu0 0.0
  %1408 = vmatpush1.msra.mxu0 0.0
  %1409 = vmatprep.subr.mxu0 0.0
  %1410 = vmatpush1.msra.mxu0 0.0
  %1411 = vmatprep.subr.mxu0 0.0
  %1412 = vmatpush1.msra.mxu0 0.0
  %1413 = vmatprep.subr.mxu0 0.0
  %1414 = vmatpush1.msra.mxu0 0.0
  %1415 = vmatprep.subr.mxu0 0.0
  %1416 = vmatpush1.msra.mxu0 0.0
  %1417 = vmatprep.subr.mxu0 0.0
  %1418 = vmatpush1.msra.mxu0 0.0
  %1419 = vmatprep.subr.mxu0 0.0
  %1420 = vmatpush1.msra.mxu0 0.0
  %1421 = vmatprep.subr.mxu0 0.0
  %1422 = vmatpush1.msra.mxu0 0.0
  %1423 = vmatprep.subr.mxu0 0.0
  %1424 = vmatpush1.msra.mxu0 0.0
  %1425 = vmatprep.subr.mxu0 0.0
  %1426 = vmatpush1.msra.mxu0 0.0
  %1427 = vmatprep.subr.mxu0 0.0
  %1428 = vmatpush1.msra.mxu0 0.0
  %1429 = vmatprep.subr.mxu0 0.0
  %1430 = vmatpush1.msra.mxu0 0.0
  %1431 = vmatprep.subr.mxu0 0.0
  %1432 = vmatpush1.msra.mxu0 0.0
  %1433 = vmatprep.subr.mxu0 0.0
  %1434 = vmatpush1.msra.mxu0 0.0
  %1435 = vmatprep.subr.mxu0 0.0
  %1436 = vmatpush1.msra.mxu0 0.0
  %1437 = vmatprep.subr.mxu0 0.0
  %1438 = vmatpush1.msra.mxu0 0.0
  %1439 = vmatprep.subr.mxu0 0.0
  %1440 = vmatpush1.msra.mxu0 0.0
  %1441 = vmatprep.subr.mxu0 0.0
  %1442 = vmatpush1.msra.mxu0 0.0
  %1443 = vmatprep.subr.mxu0 0.0
  %1444 = vmatpush1.msra.mxu0 0.0
  %1445 = vmatprep.subr.mxu0 0.0
  %1446 = vmatpush1.msra.mxu0 0.0
  %1447 = vmatprep.subr.mxu0 0.0
  %1448 = vmatpush1.msra.mxu0 0.0
  %1449 = vmatprep.subr.mxu0 0.0
  %1450 = vmatpush1.msra.mxu0 0.0
  %1451 = vmatprep.subr.mxu0 0.0
  %1452 = vmatpush1.msra.mxu0 0.0
  %1453 = vmatprep.subr.mxu0 0.0
  %1454 = vmatpush1.msra.mxu0 0.0
  %1455 = vmatprep.subr.mxu0 0.0
  %1456 = vmatpush1.msra.mxu0 0.0
  %1457 = vmatprep.subr.mxu0 0.0
  %1458 = vmatpush1.msra.mxu0 0.0
  %1459 = vmatprep.mubr.f32.mxu0 0.0
  %1460 = vmatmul.mubr.f32.gmra.mrb[0].mxu0 %v1384
  %v1461 = vpop.f32.mrb[0].mxu0
  %v1462 = vadd.f32 0.0, %v1461
  %v1463 = vpop.f32.mrb[0].mxu0
  %1464 = vmatprep.mubr.f32.mxu0 0.0
  %1465 = vmatmul.mubr.f32.gmra.mrb[0].mxu0 %v1387
  %v1466 = vpop.f32.mrb[0].mxu0
  %v1467 = vadd.f32 0.0, %v1466
  %v1468 = vpop.f32.mrb[0].mxu0
  %1469 = vmatprep.mubr.f32.mxu0 0.0
  %1470 = vmatmul.mubr.f32.gmra.mrb[0].mxu0 %v1390
  %v1471 = vpop.f32.mrb[0].mxu0
  %v1472 = vadd.f32 0.0, %v1471
  %v1473 = vpop.f32.mrb[0].mxu0
  %1474 = vmatprep.mubr.f32.mxu0 0.0
  %1475 = vmatmul.mubr.f32.gmra.mrb[0].mxu0 %v1393
  %v1476 = vpop.f32.mrb[0].mxu0
  %v1477 = vadd.f32 0.0, %v1476
  %v1478 = vpop.f32.mrb[0].mxu0
  %1479 = vdwg.mxu0
  %v1480 = vmax.f32 %v1462, 1e-30
  %v1481 = vmax.f32 %v1467, 1e-30
  %v1482 = vmax.f32 %v1472, 1e-30
  %v1483 = vmax.f32 %v1477, 1e-30
  %v1484 = vrcp.pop %v1480
  %v1485 = vrcp.pop %v1481
  %v1486 = vrcp.pop %v1482
  %v1487 = vrcp.pop %v1483
  %v1488 = vmul.f32 %v1480, %v1484
  %v1489 = vmul.f32 %v1481, %v1485
  %v1490 = vmul.f32 %v1482, %v1486
  %v1491 = vmul.f32 %v1483, %v1487
  %v1492 = vsub.f32 2.0, %v1488
  %v1493 = vsub.f32 2.0, %v1489
  %v1494 = vsub.f32 2.0, %v1490
  %v1495 = vsub.f32 2.0, %v1491
  %v1496 = vmul.f32 %v1484, %v1492
  %v1497 = vmul.f32 %v1485, %v1493
  %v1498 = vmul.f32 %v1486, %v1494
  %v1499 = vmul.f32 %v1487, %v1495
  %1501 = vset.pattern.permute.xlu0 16
  %1502 = vperm.xlu0 %1501, %v1496
  %v1503 = vpop.permute.xlu0 %1502
  %1506 = vset.pattern.permute.xlu0 16
  %1507 = vperm.xlu0 %1506, %v1497
  %v1508 = vpop.permute.xlu0 %1507
  %1511 = vset.pattern.permute.xlu0 16
  %1512 = vperm.xlu0 %1511, %v1498
  %v1513 = vpop.permute.xlu0 %1512
  %1516 = vset.pattern.permute.xlu0 16
  %1517 = vperm.xlu0 %1516, %v1499
  %v1518 = vpop.permute.xlu0 %1517
  %v1520 = vmul.f32 %v1462, %v1503
  %v1521 = vmul.f32 %v1467, %v1508
  %v1522 = vmul.f32 %v1472, %v1513
  %v1523 = vmul.f32 %v1477, %v1518
  %vm1524 = vcmask 64512
  %v1525 = vsel %vm1524, %v1319, %v1520
  %v1526 = vsel %vm1524, %v1320, %v1521
  %v1527 = vsel %vm1524, %v1321, %v1522
  %v1528 = vsel %vm1524, %v1322, %v1523
  %v1529 = vlaneseq
  %v1530 = vshrl.u32 %v1529, 7
  %v1531 = vsub.s32 0, %v1530
  %v1532 = vrot.slane %v843, %v1531
  %v1534 = vsel %vm43, %v1525, 0
  %v1537 = vsel %vm43, %v1526, 0
  %v1540 = vsel %vm43, %v1527, 0
  %v1543 = vsel %vm43, %v1528, 0
  %1545 = vmatprep.subr.mxu0 0.0
  %1546 = vmatpush1.msra.mxu0 %v841
  %1547 = vmatprep.subr.mxu0 0.0
  %1548 = vmatpush1.msra.mxu0 %v842
  %1549 = vmatprep.subr.mxu0 0.0
  %1550 = vmatpush1.msra.mxu0 0.0
  %1551 = vmatprep.subr.mxu0 0.0
  %1552 = vmatpush1.msra.mxu0 0.0
  %1553 = vmatprep.subr.mxu0 0.0
  %1554 = vmatpush1.msra.mxu0 0.0
  %1555 = vmatprep.subr.mxu0 0.0
  %1556 = vmatpush1.msra.mxu0 0.0
  %1557 = vmatprep.subr.mxu0 0.0
  %1558 = vmatpush1.msra.mxu0 0.0
  %1559 = vmatprep.subr.mxu0 0.0
  %1560 = vmatpush1.msra.mxu0 0.0
  %1561 = vmatprep.subr.mxu0 0.0
  %1562 = vmatpush1.msra.mxu0 0.0
  %1563 = vmatprep.subr.mxu0 0.0
  %1564 = vmatpush1.msra.mxu0 0.0
  %1565 = vmatprep.subr.mxu0 0.0
  %1566 = vmatpush1.msra.mxu0 0.0
  %1567 = vmatprep.subr.mxu0 0.0
  %1568 = vmatpush1.msra.mxu0 0.0
  %1569 = vmatprep.subr.mxu0 0.0
  %1570 = vmatpush1.msra.mxu0 0.0
  %1571 = vmatprep.subr.mxu0 0.0
  %1572 = vmatpush1.msra.mxu0 0.0
  %1573 = vmatprep.subr.mxu0 0.0
  %1574 = vmatpush1.msra.mxu0 0.0
  %1575 = vmatprep.subr.mxu0 0.0
  %1576 = vmatpush1.msra.mxu0 0.0
  %1577 = vmatprep.subr.mxu0 0.0
  %1578 = vmatpush1.msra.mxu0 0.0
  %1579 = vmatprep.subr.mxu0 0.0
  %1580 = vmatpush1.msra.mxu0 0.0
  %1581 = vmatprep.subr.mxu0 0.0
  %1582 = vmatpush1.msra.mxu0 0.0
  %1583 = vmatprep.subr.mxu0 0.0
  %1584 = vmatpush1.msra.mxu0 0.0
  %1585 = vmatprep.subr.mxu0 0.0
  %1586 = vmatpush1.msra.mxu0 0.0
  %1587 = vmatprep.subr.mxu0 0.0
  %1588 = vmatpush1.msra.mxu0 0.0
  %1589 = vmatprep.subr.mxu0 0.0
  %1590 = vmatpush1.msra.mxu0 0.0
  %1591 = vmatprep.subr.mxu0 0.0
  %1592 = vmatpush1.msra.mxu0 0.0
  %1593 = vmatprep.subr.mxu0 0.0
  %1594 = vmatpush1.msra.mxu0 0.0
  %1595 = vmatprep.subr.mxu0 0.0
  %1596 = vmatpush1.msra.mxu0 0.0
  %1597 = vmatprep.subr.mxu0 0.0
  %1598 = vmatpush1.msra.mxu0 0.0
  %1599 = vmatprep.subr.mxu0 0.0
  %1600 = vmatpush1.msra.mxu0 0.0
  %1601 = vmatprep.subr.mxu0 0.0
  %1602 = vmatpush1.msra.mxu0 0.0
  %1603 = vmatprep.subr.mxu0 0.0
  %1604 = vmatpush1.msra.mxu0 0.0
  %1605 = vmatprep.subr.mxu0 0.0
  %1606 = vmatpush1.msra.mxu0 0.0
  %1607 = vmatprep.subr.mxu0 0.0
  %1608 = vmatpush1.msra.mxu0 0.0
  %1609 = vmatprep.mubr.f32.mxu0 0.0
  %1610 = vmatmul.mubr.f32.gmra.mrb[0].mxu0 %v1534
  %v1611 = vpop.f32.mrb[0].mxu0
  %v1612 = vadd.f32 %v1532, %v1611
  %v1613 = vpop.f32.mrb[0].mxu0
  %1614 = vmatprep.mubr.f32.mxu0 0.0
  %1615 = vmatmul.mubr.f32.gmra.mrb[0].mxu0 %v1537
  %v1616 = vpop.f32.mrb[0].mxu0
  %v1617 = vadd.f32 %v1532, %v1616
  %v1618 = vpop.f32.mrb[0].mxu0
  %1619 = vmatprep.mubr.f32.mxu0 0.0
  %1620 = vmatmul.mubr.f32.gmra.mrb[0].mxu0 %v1540
  %v1621 = vpop.f32.mrb[0].mxu0
  %v1622 = vadd.f32 %v1532, %v1621
  %v1623 = vpop.f32.mrb[0].mxu0
  %1624 = vmatprep.mubr.f32.mxu0 0.0
  %1625 = vmatmul.mubr.f32.gmra.mrb[0].mxu0 %v1543
  %v1626 = vpop.f32.mrb[0].mxu0
  %v1627 = vadd.f32 %v1532, %v1626
  %v1628 = vpop.f32.mrb[0].mxu0
  %1629 = vdwg.mxu0
  %1630 = vst.msk [vmem:[%s3] sm:$0xff] %vm1524, %v1612
  %1631 = vst.msk [vmem:[%s3 + $0x8] sm:$0xff] %vm1524, %v1617
  %1632 = vst.msk [vmem:[%s3 + $0x10] sm:$0xff] %vm1524, %v1622
  %1633 = vst.msk [vmem:[%s3 + $0x18] sm:$0xff] %vm1524, %v1627
  // Predicated region
  $region14: #{gat_forward.1} parent=0 // pred_check
    _
  $region15: #{gat_forward.1} parent=0 // pred_check_branch
    %1635 = sbr.rel (0) target = $region17
  $region16: #{gat_forward.1} parent=0 // pred_region
    _
  $region17: #{gat_forward.1} parent=0 // pred_fallthru
    _
  // Predicated region
  $region18: #{gat_forward.1} parent=0 // pred_check
    _
  $region19: #{gat_forward.1} parent=0 // pred_check_branch
    %1637 = sbr.rel (0) target = $region21
  $region20: #{gat_forward.1} parent=0 // pred_region
    _
  $region21: #{gat_forward.1} parent=0 // pred_fallthru
    _

</llo_original>
